<compile_context>
chip_gen: v6e
topology: v6e:2x2x1
jax: 0.10.0
libtpu: 0.0.40
codegen_flags: <defaults>
</compile_context>

<pallas_src>
import jax
import jax.numpy as jnp
from jax.experimental import pallas as pl
from jax.experimental.pallas import tpu as pltpu


def ligand_encoder(x, adj, wmap, w1, wr1, w2, wr2, *, target_m=256):
    """x: [B, n_pad, F_in] f32 (padded node rows = 0),
    adj: [B, n_pad, n_pad] f32 per-graph adjacency blocks (padded rows/cols = 0),
    weights stored [in, out] (bias=False everywhere). Returns [B, H] f32."""
    B, n_in, f_in = x.shape
    H = w1.shape[1]
    f32, bf16 = jnp.float32, jnp.bfloat16

    # Fold ligandmap into GCN layer 1 and fuse conv + residual weights into a
    # single [*, 2H] matrix per layer (re-association: A@(x@W) == (A@x)@W).
    w1cat = jnp.concatenate([wmap @ w1, wmap @ wr1], axis=1)   # [F_in, 2H]
    w2cat = jnp.concatenate([w2, wr2], axis=1)                 # [H,    2H]

    # Pad node (sublane) dim to a multiple of 16 (bf16 packs [16,128] vregs)
    # and the feature (lane) dim to a multiple of 128; zero padding is exact.
    n_p = pl.cdiv(n_in, 16) * 16
    f_pad = pl.cdiv(f_in, 128) * 128

    # Graphs per grid step: stack G graphs so the slab height M = G * n_p is
    # ~target_m (default 256 -> full MXU M tiles, multiple of 128 for v5e).
    G = max(1, target_m // n_p)
    B_pad = pl.cdiv(B, G) * G            # pad batch with all-zero graphs
    num_groups = B_pad // G
    M = G * n_p

    x_p = jnp.pad(x, ((0, B_pad - B), (0, n_p - n_in), (0, f_pad - f_in)))
    adj_p = jnp.pad(adj, ((0, B_pad - B), (0, n_p - n_in), (0, n_p - n_in)))
    w1cat_p = jnp.pad(w1cat, ((0, f_pad - f_in), (0, 0)))

    # bf16 MXU inputs (0/1 adjacency is exact in bf16), f32 accumulation.
    x_b = x_p.reshape(num_groups, M, f_pad).astype(bf16)   # grouped node slab
    adj_b = adj_p.astype(bf16)                             # blocked adjacency
    w1cat_b = w1cat_p.astype(bf16)
    w2cat_b = w2cat.astype(bf16)

    def kernel(x_ref, adj_ref, w1_ref, w2_ref, out_ref):
        xs = x_ref[...]                                     # [M, f_pad]  bf16
        A = adj_ref[...]                                    # [G, n_p, n_p] bf16

        # --- layer 1: single fused weight matmul (N = 2H), then blocked agg.
        p1 = jnp.dot(xs, w1_ref[...], preferred_element_type=f32)      # [M, 2H]
        pc1 = p1[:, :H].astype(bf16).reshape(G, n_p, H)
        agg1 = jnp.einsum('gij,gjh->gih', A, pc1,
                          preferred_element_type=f32).reshape(M, H)
        z1 = jax.nn.relu(agg1) + jax.nn.relu(p1[:, H:])                # f32

        # --- layer 2
        z1b = z1.astype(bf16)
        p2 = jnp.dot(z1b, w2_ref[...], preferred_element_type=f32)     # [M, 2H]
        pc2 = p2[:, :H].astype(bf16).reshape(G, n_p, H)
        agg2 = jnp.einsum('gij,gjh->gih', A, pc2,
                          preferred_element_type=f32).reshape(M, H)
        z2 = jax.nn.relu(agg2) + jax.nn.relu(p2[:, H:])                # [M, H]

        # --- Sum pooling per graph (padded rows are exactly zero), emitted as
        #     a sublane-dense (G, H) block -> unmasked store.
        out_ref[...] = z2.reshape(G, n_p, H).sum(axis=1)               # [G, H]

    flops_per_group = (2 * M * f_pad * 2 * H        # x @ W1cat
                       + 2 * G * n_p * n_p * H      # blocked A @ p1
                       + 2 * M * H * 2 * H          # z1 @ W2cat
                       + 2 * G * n_p * n_p * H)     # blocked A @ p2
    bytes_accessed = (x_b.size * 2 + adj_b.size * 2              # bf16 inputs
                      + w1cat_b.size * 2 + w2cat_b.size * 2      # weights once
                      + B_pad * H * 4)                           # f32 output

    # NOTE: weights have constant index_maps so they are not re-DMA'd across
    # grid steps; per the review they could also be single-buffered
    # (pipeline_mode=pl.Buffered(1)) but at H=128 the VMEM saving is negligible.
    out = pl.pallas_call(
        kernel,
        out_shape=jax.ShapeDtypeStruct((B_pad, H), f32),
        grid=(num_groups,),
        in_specs=[
            pl.BlockSpec((None, M, f_pad), lambda i: (i, 0, 0)),   # node slab
            pl.BlockSpec((G, n_p, n_p), lambda i: (i, 0, 0)),      # adj blocks
            pl.BlockSpec((f_pad, 2 * H), lambda i: (0, 0)),        # W1cat (resident)
            pl.BlockSpec((H, 2 * H), lambda i: (0, 0)),            # W2cat (resident)
        ],
        out_specs=pl.BlockSpec((G, H), lambda i: (i, 0)),
        compiler_params=pltpu.CompilerParams(
            dimension_semantics=("parallel",),          # shard groups over TCs
            vmem_limit_bytes=32 * 1024 * 1024),
        cost_estimate=pl.CostEstimate(
            flops=num_groups * flops_per_group,
            transcendentals=0,
            bytes_accessed=bytes_accessed),
    )(x_b, adj_b, w1cat_b, w2cat_b)
    return out[:B]


def _reference_f32(x, adj, wmap, w1, wr1, w2, wr2):
    """Full-precision reference of the original module math (batched dense)."""
    zh = x @ wmap                                             # [B, n, H]
    z1 = jax.nn.relu(jnp.matmul(adj, zh) @ w1) + jax.nn.relu(zh @ wr1)
    z2 = jax.nn.relu(jnp.matmul(adj, z1) @ w2) + jax.nn.relu(z1 @ wr2)
    return z2.sum(axis=1)                                     # [B, H]


def _reference_bf16(x, adj, wmap, w1, wr1, w2, wr2):
    """Reference with the same fold / fusion / re-association / bf16 recast
    points as the kernel."""
    f32, bf16 = jnp.float32, jnp.bfloat16
    H = w1.shape[1]
    w1cat = jnp.concatenate([wmap @ w1, wmap @ wr1], axis=1).astype(bf16)
    w2cat = jnp.concatenate([w2, wr2], axis=1).astype(bf16)
    xb, ab = x.astype(bf16), adj.astype(bf16)

    p1 = jnp.matmul(xb, w1cat, preferred_element_type=f32)
    agg1 = jnp.matmul(ab, p1[..., :H].astype(bf16), preferred_element_type=f32)
    z1 = jax.nn.relu(agg1) + jax.nn.relu(p1[..., H:])
    z1b = z1.astype(bf16)
    p2 = jnp.matmul(z1b, w2cat, preferred_element_type=f32)
    agg2 = jnp.matmul(ab, p2[..., :H].astype(bf16), preferred_element_type=f32)
    z2 = jax.nn.relu(agg2) + jax.nn.relu(p2[..., H:])
    return z2.sum(axis=1)


if __name__ == "__main__":
    # Small synthetic batched graph: B=2 ragged graphs (8 and 5 real nodes),
    # padded to n_pad=8 nodes each; in_features=34 (module default),
    # hidden_features=[128, 128].
    B = 2
    n_nodes = [8, 5]
    n_pad = 8
    F_IN, H = 34, 128

    key = jax.random.PRNGKey(0)
    k_x, k_adj, k_wmap, k_w1, k_wr1, k_w2, k_wr2 = jax.random.split(key, 7)

    node_mask = (jnp.arange(n_pad)[None, :]
                 < jnp.asarray(n_nodes)[:, None]).astype(jnp.float32)   # [B, n_pad]

    # Node features, padded nodes zeroed.
    x = jax.random.normal(k_x, (B, n_pad, F_IN), dtype=jnp.float32)
    x = x * node_mask[:, :, None]

    # Per-graph symmetric adjacency (random undirected edges), no self-loops,
    # zero on padded rows/cols.
    adjs = []
    for b in range(B):
        kb = jax.random.fold_in(k_adj, b)
        r = jax.random.uniform(kb, (n_pad, n_pad))
        a = (r < 0.4).astype(jnp.float32)
        a = jnp.maximum(a, a.T)
        a = a * (1.0 - jnp.eye(n_pad))
        m = node_mask[b]
        a = a * m[:, None] * m[None, :]
        adjs.append(a)
    adj = jnp.stack(adjs)                                               # [B, n_pad, n_pad]

    # Deterministic parameters (all Linear layers bias=False). Stored as
    # [in, out] so the kernel does x @ W (equivalent to torch's x @ W.T).
    scale = 0.1
    wmap = scale * jax.random.normal(k_wmap, (F_IN, H), dtype=jnp.float32)
    w1 = scale * jax.random.normal(k_w1, (H, H), dtype=jnp.float32)
    wr1 = scale * jax.random.normal(k_wr1, (H, H), dtype=jnp.float32)
    w2 = scale * jax.random.normal(k_w2, (H, H), dtype=jnp.float32)
    wr2 = scale * jax.random.normal(k_wr2, (H, H), dtype=jnp.float32)

    out = ligand_encoder(x, adj, wmap, w1, wr1, w2, wr2)
    out = jax.block_until_ready(out)
    assert out.shape == (B, H), out.shape

    # Exact-math check against a reference with the same bf16/fold/fusion
    # structure as the kernel.
    ref_bf16 = _reference_bf16(x, adj, wmap, w1, wr1, w2, wr2)
    assert jnp.allclose(out, ref_bf16, atol=1e-3, rtol=1e-3), \
        "mismatch vs bf16-matched reference"

    # Semantic-fidelity check against the full f32 module math (bf16 MXU
    # inputs introduce ~1% relative error, hence the loose tolerance).
    ref_f32 = _reference_f32(x, adj, wmap, w1, wr1, w2, wr2)
    assert jnp.allclose(out, ref_f32, atol=5e-1, rtol=5e-2), \
        "mismatch vs f32 reference"

    print("KERNEL_OK")
</pallas_src>

<mosaic_0001>
module attributes {stable_mosaic.version = 11 : i64} {
  func.func @kernel(%arg0: i32, %arg1: memref<1x256x128xbf16, #tpu.memory_space<vmem>>, %arg2: memref<16x16x16xbf16, #tpu.memory_space<vmem>>, %arg3: memref<128x256xbf16, #tpu.memory_space<vmem>>, %arg4: memref<128x256xbf16, #tpu.memory_space<vmem>>, %arg5: memref<16x128xf32, #tpu.memory_space<vmem>>) attributes {dimension_semantics = [#tpu.dimension_semantics<parallel>], iteration_bounds = array<i64: 1>, scalar_prefetch = 0 : i64, scratch_operands = 0 : i64, tpu.core_type = #tpu.core_type<tc>, window_params = [{transform_indices = @transform_0, window_bounds = array<i64: 1, 256, 128>}, {transform_indices = @transform_1, window_bounds = array<i64: 16, 16, 16>}, {pipeline_mode = #tpu.pipeline_mode<synchronous>, transform_indices = @transform_2, window_bounds = array<i64: 128, 256>}, {pipeline_mode = #tpu.pipeline_mode<synchronous>, transform_indices = @transform_3, window_bounds = array<i64: 128, 256>}, {transform_indices = @transform_4, window_bounds = array<i64: 16, 128>}]} {
    %c0 = arith.constant 0 : index
    %c0_0 = arith.constant 0 : index
    %c0_1 = arith.constant 0 : index
    %0 = vector.load %arg1[%c0, %c0_0, %c0_1] : memref<1x256x128xbf16, #tpu.memory_space<vmem>>, vector<1x256x128xbf16>
    %1 = vector.shape_cast %0 : vector<1x256x128xbf16> to vector<256x128xbf16>
    %c0_2 = arith.constant 0 : index
    %c0_3 = arith.constant 0 : index
    %c0_4 = arith.constant 0 : index
    %2 = vector.load %arg2[%c0_2, %c0_3, %c0_4] : memref<16x16x16xbf16, #tpu.memory_space<vmem>>, vector<16x16x16xbf16>
    %c0_5 = arith.constant 0 : index
    %c0_6 = arith.constant 0 : index
    %3 = vector.load %arg3[%c0_5, %c0_6] : memref<128x256xbf16, #tpu.memory_space<vmem>>, vector<128x256xbf16>
    %cst = arith.constant dense<0.000000e+00> : vector<256x256xf32>
    %4 = tpu.matmul %1, %3, %cst {dimension_numbers = #tpu.dot_dimension_numbers<[1], [0], [0], [1], [0, 0, 1, 1], [], []>} : vector<256x128xbf16>, vector<128x256xbf16>, vector<256x256xf32> -> vector<256x256xf32>
    %5 = vector.extract_strided_slice %4 {offsets = [0, 0], sizes = [256, 128], strides = [1, 1]} : vector<256x256xf32> to vector<256x128xf32>
    %6 = arith.truncf %5 : vector<256x128xf32> to vector<256x128xbf16>
    %7 = vector.shape_cast %6 : vector<256x128xbf16> to vector<16x16x128xbf16>
    "tpu.trace_start"() <{level = 10 : i32, message = "gij,gjh->gih"}> : () -> ()
    %cst_7 = arith.constant dense<0.000000e+00> : vector<16x16x128xf32>
    %8 = tpu.matmul %2, %7, %cst_7 {dimension_numbers = #tpu.dot_dimension_numbers<[2], [1], [1], [2], [0, 0, 0, 1, 1, 2], [0], [0]>} : vector<16x16x16xbf16>, vector<16x16x128xbf16>, vector<16x16x128xf32> -> vector<16x16x128xf32>
    "tpu.trace_stop"() : () -> ()
    %9 = vector.shape_cast %8 : vector<16x16x128xf32> to vector<256x128xf32>
    %cst_8 = arith.constant 0.000000e+00 : f32
    %10 = vector.broadcast %cst_8 : f32 to vector<256x128xf32>
    %11 = arith.maximumf %9, %10 : vector<256x128xf32>
    %12 = vector.extract_strided_slice %4 {offsets = [0, 128], sizes = [256, 128], strides = [1, 1]} : vector<256x256xf32> to vector<256x128xf32>
    %cst_9 = arith.constant 0.000000e+00 : f32
    %13 = vector.broadcast %cst_9 : f32 to vector<256x128xf32>
    %14 = arith.maximumf %12, %13 : vector<256x128xf32>
    %15 = arith.addf %11, %14 : vector<256x128xf32>
    %16 = arith.truncf %15 : vector<256x128xf32> to vector<256x128xbf16>
    %c0_10 = arith.constant 0 : index
    %c0_11 = arith.constant 0 : index
    %17 = vector.load %arg4[%c0_10, %c0_11] : memref<128x256xbf16, #tpu.memory_space<vmem>>, vector<128x256xbf16>
    %cst_12 = arith.constant dense<0.000000e+00> : vector<256x256xf32>
    %18 = tpu.matmul %16, %17, %cst_12 {dimension_numbers = #tpu.dot_dimension_numbers<[1], [0], [0], [1], [0, 0, 1, 1], [], []>} : vector<256x128xbf16>, vector<128x256xbf16>, vector<256x256xf32> -> vector<256x256xf32>
    %19 = vector.extract_strided_slice %18 {offsets = [0, 0], sizes = [256, 128], strides = [1, 1]} : vector<256x256xf32> to vector<256x128xf32>
    %20 = arith.truncf %19 : vector<256x128xf32> to vector<256x128xbf16>
    %21 = vector.shape_cast %20 : vector<256x128xbf16> to vector<16x16x128xbf16>
    "tpu.trace_start"() <{level = 10 : i32, message = "gij,gjh->gih"}> : () -> ()
    %cst_13 = arith.constant dense<0.000000e+00> : vector<16x16x128xf32>
    %22 = tpu.matmul %2, %21, %cst_13 {dimension_numbers = #tpu.dot_dimension_numbers<[2], [1], [1], [2], [0, 0, 0, 1, 1, 2], [0], [0]>} : vector<16x16x16xbf16>, vector<16x16x128xbf16>, vector<16x16x128xf32> -> vector<16x16x128xf32>
    "tpu.trace_stop"() : () -> ()
    %23 = vector.shape_cast %22 : vector<16x16x128xf32> to vector<256x128xf32>
    %cst_14 = arith.constant 0.000000e+00 : f32
    %24 = vector.broadcast %cst_14 : f32 to vector<256x128xf32>
    %25 = arith.maximumf %23, %24 : vector<256x128xf32>
    %26 = vector.extract_strided_slice %18 {offsets = [0, 128], sizes = [256, 128], strides = [1, 1]} : vector<256x256xf32> to vector<256x128xf32>
    %cst_15 = arith.constant 0.000000e+00 : f32
    %27 = vector.broadcast %cst_15 : f32 to vector<256x128xf32>
    %28 = arith.maximumf %26, %27 : vector<256x128xf32>
    %29 = arith.addf %25, %28 : vector<256x128xf32>
    %30 = vector.shape_cast %29 : vector<256x128xf32> to vector<16x16x128xf32>
    %cst_16 = arith.constant dense<0.000000e+00> : vector<16x128xf32>
    %31 = vector.multi_reduction <add>, %30, %cst_16 [1] : vector<16x16x128xf32> to vector<16x128xf32>
    %c0_17 = arith.constant 0 : index
    %c0_18 = arith.constant 0 : index
    %32 = vector.load %arg5[%c0_17, %c0_18] : memref<16x128xf32, #tpu.memory_space<vmem>>, vector<16x128xf32>
    tpu.vector_store %arg5[%c0_17, %c0_18], %31 {strides = array<i32>} : memref<16x128xf32, #tpu.memory_space<vmem>>, vector<16x128xf32>,
    return
  }
  func.func @transform_0(%arg0: i32) -> (i32, i32, i32) {
    %c0_i32 = arith.constant 0 : i32
    %c0_i32_0 = arith.constant 0 : i32
    %c0_i32_1 = arith.constant 0 : i32
    return %arg0, %c0_i32, %c0_i32_0 : i32, i32, i32
  }
  func.func @transform_1(%arg0: i32) -> (i32, i32, i32) {
    %c0_i32 = arith.constant 0 : i32
    %c0_i32_0 = arith.constant 0 : i32
    %c0_i32_1 = arith.constant 0 : i32
    return %arg0, %c0_i32, %c0_i32_0 : i32, i32, i32
  }
  func.func @transform_2(%arg0: i32) -> (i32, i32) {
    %c0_i32 = arith.constant 0 : i32
    %c0_i32_0 = arith.constant 0 : i32
    %c0_i32_1 = arith.constant 0 : i32
    return %c0_i32, %c0_i32_0 : i32, i32
  }
  func.func @transform_3(%arg0: i32) -> (i32, i32) {
    %c0_i32 = arith.constant 0 : i32
    %c0_i32_0 = arith.constant 0 : i32
    %c0_i32_1 = arith.constant 0 : i32
    return %c0_i32, %c0_i32_0 : i32, i32
  }
  func.func @transform_4(%arg0: i32) -> (i32, i32) {
    %c0_i32 = arith.constant 0 : i32
    %c0_i32_0 = arith.constant 0 : i32
    return %arg0, %c0_i32 : i32, i32
  }
}

</mosaic_0001>

<llo_original>
// kernel: tpu_custom_call.1
$region0: #{tpu_custom_call.1}
  #allocation0 [shape = 'u32[]', space=smem, size = 0x4, offset = 0x4, fixed_abs, tag = 'smem constant byte address 0x4 - core index']
  #allocation1 [shape = 'u32[144,128]{1,0:T(1,128)}', space=vmem, size = 0x12000, scoped, tag = 'internal scratch']
  %s0 = inlined_call_operand.hbm [shape: bf16[1,256,128], index: 0, kind: input, shape index: {}]
  %s1 = inlined_call_operand.hbm [shape: bf16[16,16,16], index: 1, kind: input, shape index: {}]
  %s2 = inlined_call_operand.hbm [shape: bf16[128,256], index: 2, kind: input, shape index: {}]
  %s3 = inlined_call_operand.hbm [shape: bf16[128,256], index: 3, kind: input, shape index: {}]
  %s4 = inlined_call_operand.hbm [shape: f32[16,128], index: 4, kind: output, shape index: {}]
  %s5 = sld [smem:[#allocation0]]
  $region42: #{tpu_custom_call.1} parent=0
    _
  %s7 = ssub.s32 1, %s5
  %s8 = scalar_select 0, %s7, %s5
  $region1: #{tpu_custom_call.1} parent=0
    #allocation2 [shape = 'u8[65536]{0}', space=vmem, size = 0x10000, scoped, tag = 'input window, operand 0, single buffered']
    #allocation3 [shape = 's32[1]{0}', space=sflag, size = 0x4, scoped, tag = 'scoped memory for tpu_custom_call.1']
    #allocation4 [shape = 's32[1]{0}', space=sflag, size = 0x4, scoped, tag = 'scoped memory for tpu_custom_call.1']
    #allocation5 [shape = 'u8[65536]{0}', space=vmem, size = 0x10000, scoped, tag = 'input window, operand 1, single buffered']
    #allocation6 [shape = 's32[1]{0}', space=sflag, size = 0x4, scoped, tag = 'scoped memory for tpu_custom_call.1']
    #allocation7 [shape = 'u8[65536]{0}', space=vmem, size = 0x10000, scoped, tag = 'input window, operand 2, single buffered']
    #allocation8 [shape = 'u8[65536]{0}', space=vmem, size = 0x10000, scoped, tag = 'input window, operand 3, single buffered']
    #allocation9 [shape = 's32[1]{0}', space=sflag, size = 0x4, scoped, tag = 'scoped memory for tpu_custom_call.1']
    #allocation10 [shape = 'u8[8192]{0}', space=vmem, size = 0x2000, scoped, tag = 'output window, operand 0, single buffered']
    %9 = vsyncpa [#allocation3], 0
    %10 = vsyncpa [#allocation6], 0
    %11 = vsyncpa [#allocation9], 0
    %12 = vsyncpa [#allocation4], 0
    // Predicated region
    $region2: #{tpu_custom_call.1} parent=1 // pred_check
      _
    $region3: #{tpu_custom_call.1} parent=1 // pred_check_branch
      %14 = sbr.rel (0) target = $region5
    $region4: #{tpu_custom_call.1} parent=1 // pred_region
      %s16 = ssub.s32 2048, 2048
      %17 = vsyncadd [#allocation3], %s16
      %s18 = sshll.u32 [#allocation2], 4
      %s19 = int_to_ptr.vmem [resolvable:$true] %s18
      %24 = dma.hbm_to_vmem [thread:$0]  %s0, 2048, %s19, [#allocation3], 64, 64, 4
    $region5: #{tpu_custom_call.1} parent=1 // pred_fallthru
      _
    // Predicated region
    $region6: #{tpu_custom_call.1} parent=1 // pred_check
      _
    $region7: #{tpu_custom_call.1} parent=1 // pred_check_branch
      %26 = sbr.rel (0) target = $region9
    $region8: #{tpu_custom_call.1} parent=1 // pred_region
      %s28 = ssub.s32 2048, 2048
      %29 = vsyncadd [#allocation6], %s28
      %s30 = sshll.u32 [#allocation5], 4
      %s31 = int_to_ptr.vmem [resolvable:$true] %s30
      %36 = dma.hbm_to_vmem [thread:$0]  %s1, 2048, %s31, [#allocation6], 64, 64, 4
    $region9: #{tpu_custom_call.1} parent=1 // pred_fallthru
      _
    // Predicated region
    $region10: #{tpu_custom_call.1} parent=1 // pred_check
      _
    $region11: #{tpu_custom_call.1} parent=1 // pred_check_branch
      %38 = sbr.rel (0) target = $region13
    $region12: #{tpu_custom_call.1} parent=1 // pred_region
      %s40 = ssub.s32 2048, 2048
      %41 = vsyncadd [#allocation6], %s40
      %s42 = sshll.u32 [#allocation7], 4
      %s43 = int_to_ptr.vmem [resolvable:$true] %s42
      %48 = dma.hbm_to_vmem [thread:$0]  %s2, 2048, %s43, [#allocation6], 128, 128, 8
    $region13: #{tpu_custom_call.1} parent=1 // pred_fallthru
      _
    // Predicated region
    $region14: #{tpu_custom_call.1} parent=1 // pred_check
      _
    $region15: #{tpu_custom_call.1} parent=1 // pred_check_branch
      %50 = sbr.rel (0) target = $region17
    $region16: #{tpu_custom_call.1} parent=1 // pred_region
      %s52 = ssub.s32 2048, 2048
      %53 = vsyncadd [#allocation9], %s52
      %s54 = sshll.u32 [#allocation8], 4
      %s55 = int_to_ptr.vmem [resolvable:$true] %s54
      %60 = dma.hbm_to_vmem [thread:$0]  %s3, 2048, %s55, [#allocation9], 128, 128, 8
    $region17: #{tpu_custom_call.1} parent=1 // pred_fallthru
      _
    // Predicated region
    $region18: #{tpu_custom_call.1} parent=1 // pred_check
      _
    $region19: #{tpu_custom_call.1} parent=1 // pred_check_branch
      %62 = sbr.rel (0) target = $region21
    $region20: #{tpu_custom_call.1} parent=1 // pred_region
      %63 = dma.done [#allocation3], 2048
    $region21: #{tpu_custom_call.1} parent=1 // pred_fallthru
      _
    // Predicated region
    $region22: #{tpu_custom_call.1} parent=1 // pred_check
      _
    $region23: #{tpu_custom_call.1} parent=1 // pred_check_branch
      %65 = sbr.rel (0) target = $region25
    $region24: #{tpu_custom_call.1} parent=1 // pred_region
      %66 = dma.done [#allocation6], 2048
    $region25: #{tpu_custom_call.1} parent=1 // pred_fallthru
      _
    // Predicated region
    $region26: #{tpu_custom_call.1} parent=1 // pred_check
      _
    $region27: #{tpu_custom_call.1} parent=1 // pred_check_branch
      %68 = sbr.rel (0) target = $region29
    $region28: #{tpu_custom_call.1} parent=1 // pred_region
      %69 = dma.done [#allocation6], 2048
    $region29: #{tpu_custom_call.1} parent=1 // pred_fallthru
      _
    // Predicated region
    $region30: #{tpu_custom_call.1} parent=1 // pred_check
      _
    $region31: #{tpu_custom_call.1} parent=1 // pred_check_branch
      %71 = sbr.rel (0) target = $region33
    $region32: #{tpu_custom_call.1} parent=1 // pred_region
      %72 = dma.done [#allocation9], 2048
    $region33: #{tpu_custom_call.1} parent=1 // pred_fallthru
      _
    %v74 = vld [vmem:[#allocation2] sm:$0xf]
    %v75 = vld [vmem:[#allocation2 + $0x4] sm:$0xf]
    %v76 = vld [vmem:[#allocation2 + $0x8] sm:$0xf]
    %v77 = vld [vmem:[#allocation2 + $0xc] sm:$0xf]
    %v78 = vld [vmem:[#allocation2 + $0x10] sm:$0xf]
    %v79 = vld [vmem:[#allocation2 + $0x14] sm:$0xf]
    %v80 = vld [vmem:[#allocation2 + $0x18] sm:$0xf]
    %v81 = vld [vmem:[#allocation2 + $0x1c] sm:$0xf]
    %v82 = vld [vmem:[#allocation2 + $0x20] sm:$0xf]
    %v83 = vld [vmem:[#allocation2 + $0x24] sm:$0xf]
    %v84 = vld [vmem:[#allocation2 + $0x28] sm:$0xf]
    %v85 = vld [vmem:[#allocation2 + $0x2c] sm:$0xf]
    %v86 = vld [vmem:[#allocation2 + $0x30] sm:$0xf]
    %v87 = vld [vmem:[#allocation2 + $0x34] sm:$0xf]
    %v88 = vld [vmem:[#allocation2 + $0x38] sm:$0xf]
    %v89 = vld [vmem:[#allocation2 + $0x3c] sm:$0xf]
    %v90 = vld [vmem:[#allocation2 + $0x40] sm:$0xf]
    %v91 = vld [vmem:[#allocation2 + $0x44] sm:$0xf]
    %v92 = vld [vmem:[#allocation2 + $0x48] sm:$0xf]
    %v93 = vld [vmem:[#allocation2 + $0x4c] sm:$0xf]
    %v94 = vld [vmem:[#allocation2 + $0x50] sm:$0xf]
    %v95 = vld [vmem:[#allocation2 + $0x54] sm:$0xf]
    %v96 = vld [vmem:[#allocation2 + $0x58] sm:$0xf]
    %v97 = vld [vmem:[#allocation2 + $0x5c] sm:$0xf]
    %v98 = vld [vmem:[#allocation2 + $0x60] sm:$0xf]
    %v99 = vld [vmem:[#allocation2 + $0x64] sm:$0xf]
    %v100 = vld [vmem:[#allocation2 + $0x68] sm:$0xf]
    %v101 = vld [vmem:[#allocation2 + $0x6c] sm:$0xf]
    %v102 = vld [vmem:[#allocation2 + $0x70] sm:$0xf]
    %v103 = vld [vmem:[#allocation2 + $0x74] sm:$0xf]
    %v104 = vld [vmem:[#allocation2 + $0x78] sm:$0xf]
    %v105 = vld [vmem:[#allocation2 + $0x7c] sm:$0xf]
    %v106 = vld [vmem:[#allocation5] sm:$0xf]
    %v107 = vld [vmem:[#allocation5 + $0x4] sm:$0xf]
    %v108 = vld [vmem:[#allocation5 + $0x8] sm:$0xf]
    %v109 = vld [vmem:[#allocation5 + $0xc] sm:$0xf]
    %v110 = vld [vmem:[#allocation5 + $0x10] sm:$0xf]
    %v111 = vld [vmem:[#allocation5 + $0x14] sm:$0xf]
    %v112 = vld [vmem:[#allocation5 + $0x18] sm:$0xf]
    %v113 = vld [vmem:[#allocation5 + $0x1c] sm:$0xf]
    %v114 = vld [vmem:[#allocation5 + $0x20] sm:$0xf]
    %v115 = vld [vmem:[#allocation5 + $0x24] sm:$0xf]
    %v116 = vld [vmem:[#allocation5 + $0x28] sm:$0xf]
    %v117 = vld [vmem:[#allocation5 + $0x2c] sm:$0xf]
    %v118 = vld [vmem:[#allocation5 + $0x30] sm:$0xf]
    %v119 = vld [vmem:[#allocation5 + $0x34] sm:$0xf]
    %v120 = vld [vmem:[#allocation5 + $0x38] sm:$0xf]
    %v121 = vld [vmem:[#allocation5 + $0x3c] sm:$0xf]
    %v122 = vld [vmem:[#allocation5 + $0x40] sm:$0xf]
    %v123 = vld [vmem:[#allocation5 + $0x44] sm:$0xf]
    %v124 = vld [vmem:[#allocation5 + $0x48] sm:$0xf]
    %v125 = vld [vmem:[#allocation5 + $0x4c] sm:$0xf]
    %v126 = vld [vmem:[#allocation5 + $0x50] sm:$0xf]
    %v127 = vld [vmem:[#allocation5 + $0x54] sm:$0xf]
    %v128 = vld [vmem:[#allocation5 + $0x58] sm:$0xf]
    %v129 = vld [vmem:[#allocation5 + $0x5c] sm:$0xf]
    %v130 = vld [vmem:[#allocation5 + $0x60] sm:$0xf]
    %v131 = vld [vmem:[#allocation5 + $0x64] sm:$0xf]
    %v132 = vld [vmem:[#allocation5 + $0x68] sm:$0xf]
    %v133 = vld [vmem:[#allocation5 + $0x6c] sm:$0xf]
    %v134 = vld [vmem:[#allocation5 + $0x70] sm:$0xf]
    %v135 = vld [vmem:[#allocation5 + $0x74] sm:$0xf]
    %v136 = vld [vmem:[#allocation5 + $0x78] sm:$0xf]
    %v137 = vld [vmem:[#allocation5 + $0x7c] sm:$0xf]
    %v138 = vld [vmem:[#allocation7] sm:$0xff]
    %v139 = vld [vmem:[#allocation7 + $0x8] sm:$0xff]
    %v140 = vld [vmem:[#allocation7 + $0x10] sm:$0xff]
    %v141 = vld [vmem:[#allocation7 + $0x18] sm:$0xff]
    %v142 = vld [vmem:[#allocation7 + $0x20] sm:$0xff]
    %v143 = vld [vmem:[#allocation7 + $0x28] sm:$0xff]
    %v144 = vld [vmem:[#allocation7 + $0x30] sm:$0xff]
    %v145 = vld [vmem:[#allocation7 + $0x38] sm:$0xff]
    %v146 = vld [vmem:[#allocation7 + $0x40] sm:$0xff]
    %v147 = vld [vmem:[#allocation7 + $0x48] sm:$0xff]
    %v148 = vld [vmem:[#allocation7 + $0x50] sm:$0xff]
    %v149 = vld [vmem:[#allocation7 + $0x58] sm:$0xff]
    %v150 = vld [vmem:[#allocation7 + $0x60] sm:$0xff]
    %v151 = vld [vmem:[#allocation7 + $0x68] sm:$0xff]
    %v152 = vld [vmem:[#allocation7 + $0x70] sm:$0xff]
    %v153 = vld [vmem:[#allocation7 + $0x78] sm:$0xff]
    %v186 = vunpack.c.l.b16 %v74
    %v187 = vunpack.c.l.b16 %v75
    %v188 = vunpack.c.l.b16 %v76
    %v189 = vunpack.c.l.b16 %v77
    %v190 = vunpack.c.l.b16 %v78
    %v191 = vunpack.c.l.b16 %v79
    %v192 = vunpack.c.l.b16 %v80
    %v193 = vunpack.c.l.b16 %v81
    %v194 = vunpack.c.l.b16 %v82
    %v195 = vunpack.c.l.b16 %v83
    %v196 = vunpack.c.l.b16 %v84
    %v197 = vunpack.c.l.b16 %v85
    %v198 = vunpack.c.l.b16 %v86
    %v199 = vunpack.c.l.b16 %v87
    %v200 = vunpack.c.l.b16 %v88
    %v201 = vunpack.c.l.b16 %v89
    %v202 = vunpack.c.l.b16 %v90
    %v203 = vunpack.c.l.b16 %v91
    %v204 = vunpack.c.l.b16 %v92
    %v205 = vunpack.c.l.b16 %v93
    %v206 = vunpack.c.l.b16 %v94
    %v207 = vunpack.c.l.b16 %v95
    %v208 = vunpack.c.l.b16 %v96
    %v209 = vunpack.c.l.b16 %v97
    %v210 = vunpack.c.l.b16 %v98
    %v211 = vunpack.c.l.b16 %v99
    %v212 = vunpack.c.l.b16 %v100
    %v213 = vunpack.c.l.b16 %v101
    %v214 = vunpack.c.l.b16 %v102
    %v215 = vunpack.c.l.b16 %v103
    %v216 = vunpack.c.l.b16 %v104
    %v217 = vunpack.c.l.b16 %v105
    %v218 = vpack.c.b16 %v187, %v186
    %v219 = vpack.c.b16 %v189, %v188
    %v220 = vpack.c.b16 %v191, %v190
    %v221 = vpack.c.b16 %v193, %v192
    %v222 = vpack.c.b16 %v195, %v194
    %v223 = vpack.c.b16 %v197, %v196
    %v224 = vpack.c.b16 %v199, %v198
    %v225 = vpack.c.b16 %v201, %v200
    %v226 = vpack.c.b16 %v203, %v202
    %v227 = vpack.c.b16 %v205, %v204
    %v228 = vpack.c.b16 %v207, %v206
    %v229 = vpack.c.b16 %v209, %v208
    %v230 = vpack.c.b16 %v211, %v210
    %v231 = vpack.c.b16 %v213, %v212
    %v232 = vpack.c.b16 %v215, %v214
    %v233 = vpack.c.b16 %v217, %v216
    %v266 = vunpack.c.l.b16 %v138
    %v267 = vunpack.c.h.b16 %v138
    %v268 = vunpack.c.l.b16 %v139
    %v269 = vunpack.c.h.b16 %v139
    %v270 = vunpack.c.l.b16 %v140
    %v271 = vunpack.c.h.b16 %v140
    %v272 = vunpack.c.l.b16 %v141
    %v273 = vunpack.c.h.b16 %v141
    %v274 = vunpack.c.l.b16 %v142
    %v275 = vunpack.c.h.b16 %v142
    %v276 = vunpack.c.l.b16 %v143
    %v277 = vunpack.c.h.b16 %v143
    %v278 = vunpack.c.l.b16 %v144
    %v279 = vunpack.c.h.b16 %v144
    %v280 = vunpack.c.l.b16 %v145
    %v281 = vunpack.c.h.b16 %v145
    %v282 = vunpack.c.l.b16 %v146
    %v283 = vunpack.c.h.b16 %v146
    %v284 = vunpack.c.l.b16 %v147
    %v285 = vunpack.c.h.b16 %v147
    %v286 = vunpack.c.l.b16 %v148
    %v287 = vunpack.c.h.b16 %v148
    %v288 = vunpack.c.l.b16 %v149
    %v289 = vunpack.c.h.b16 %v149
    %v290 = vunpack.c.l.b16 %v150
    %v291 = vunpack.c.h.b16 %v150
    %v292 = vunpack.c.l.b16 %v151
    %v293 = vunpack.c.h.b16 %v151
    %v294 = vunpack.c.l.b16 %v152
    %v295 = vunpack.c.h.b16 %v152
    %v296 = vunpack.c.l.b16 %v153
    %v297 = vunpack.c.h.b16 %v153
    %v298 = vpack.c.b16 %v268, %v266
    %v299 = vpack.c.b16 %v269, %v267
    %v300 = vpack.c.b16 %v272, %v270
    %v301 = vpack.c.b16 %v273, %v271
    %v302 = vpack.c.b16 %v276, %v274
    %v303 = vpack.c.b16 %v277, %v275
    %v304 = vpack.c.b16 %v280, %v278
    %v305 = vpack.c.b16 %v281, %v279
    %v306 = vpack.c.b16 %v284, %v282
    %v307 = vpack.c.b16 %v285, %v283
    %v308 = vpack.c.b16 %v288, %v286
    %v309 = vpack.c.b16 %v289, %v287
    %v310 = vpack.c.b16 %v292, %v290
    %v311 = vpack.c.b16 %v293, %v291
    %v312 = vpack.c.b16 %v296, %v294
    %v313 = vpack.c.b16 %v297, %v295
    %330 = vmatprep.subr.bf16.mxu0 %v313
    %331 = vmatpush1.bf16.msra.mxu0 %v312
    %332 = vmatprep.subr.bf16.mxu0 %v311
    %333 = vmatpush1.bf16.msra.mxu0 %v310
    %334 = vmatprep.subr.bf16.mxu0 %v309
    %335 = vmatpush1.bf16.msra.mxu0 %v308
    %336 = vmatprep.subr.bf16.mxu0 %v307
    %337 = vmatpush1.bf16.msra.mxu0 %v306
    %338 = vmatprep.subr.bf16.mxu0 %v305
    %339 = vmatpush1.bf16.msra.mxu0 %v304
    %340 = vmatprep.subr.bf16.mxu0 %v303
    %341 = vmatpush1.bf16.msra.mxu0 %v302
    %342 = vmatprep.subr.bf16.mxu0 %v301
    %343 = vmatpush1.bf16.msra.mxu0 %v300
    %344 = vmatprep.subr.bf16.mxu0 %v299
    %345 = vmatpush1.bf16.msra.mxu0 %v298
    %346 = vmatprep.subr.bf16.mxu0 0
    %347 = vmatpush2.bf16.msra.mxu0 0
    %348 = vmatprep.subr.bf16.mxu0 0
    %349 = vmatpush2.bf16.msra.mxu0 0
    %350 = vmatprep.subr.bf16.mxu0 0
    %351 = vmatpush2.bf16.msra.mxu0 0
    %352 = vmatprep.subr.bf16.mxu0 0
    %353 = vmatpush2.bf16.msra.mxu0 0
    %354 = vmatprep.subr.bf16.mxu0 0
    %355 = vmatpush2.bf16.msra.mxu0 0
    %356 = vmatprep.subr.bf16.mxu0 0
    %357 = vmatpush2.bf16.msra.mxu0 0
    %358 = vmatprep.subr.bf16.mxu0 0
    %359 = vmatpush2.bf16.msra.mxu0 0
    %360 = vmatprep.subr.bf16.mxu0 0
    %361 = vmatpush2.bf16.msra.mxu0 0
    %362 = vmatprep.mubr.bf16.mxu0 0
    %363 = vmatmul.mubr.bf16.gmra.mxu0 %v218
    %v364 = vpop.f32.mrf.mxu0
    %v365 = vadd.f32 0.0, %v364
    %v366 = vpop.f32.mrf.mxu0
    %v367 = vadd.f32 0.0, %v366
    %v368 = vpop.f32.mrf.mxu0
    %v369 = vadd.f32 0.0, %v368
    %v370 = vpop.f32.mrf.mxu0
    %v371 = vadd.f32 0.0, %v370
    %372 = vmatprep.mubr.bf16.mxu0 0
    %373 = vmatmul.mubr.bf16.gmra.mxu0 %v219
    %v374 = vpop.f32.mrf.mxu0
    %v375 = vadd.f32 0.0, %v374
    %v376 = vpop.f32.mrf.mxu0
    %v377 = vadd.f32 0.0, %v376
    %v378 = vpop.f32.mrf.mxu0
    %v379 = vadd.f32 0.0, %v378
    %v380 = vpop.f32.mrf.mxu0
    %v381 = vadd.f32 0.0, %v380
    %382 = vmatprep.mubr.bf16.mxu0 0
    %383 = vmatmul.mubr.bf16.gmra.mxu0 %v220
    %v384 = vpop.f32.mrf.mxu0
    %v385 = vadd.f32 0.0, %v384
    %v386 = vpop.f32.mrf.mxu0
    %v387 = vadd.f32 0.0, %v386
    %v388 = vpop.f32.mrf.mxu0
    %v389 = vadd.f32 0.0, %v388
    %v390 = vpop.f32.mrf.mxu0
    %v391 = vadd.f32 0.0, %v390
    %392 = vmatprep.mubr.bf16.mxu0 0
    %393 = vmatmul.mubr.bf16.gmra.mxu0 %v221
    %v394 = vpop.f32.mrf.mxu0
    %v395 = vadd.f32 0.0, %v394
    %v396 = vpop.f32.mrf.mxu0
    %v397 = vadd.f32 0.0, %v396
    %v398 = vpop.f32.mrf.mxu0
    %v399 = vadd.f32 0.0, %v398
    %v400 = vpop.f32.mrf.mxu0
    %v401 = vadd.f32 0.0, %v400
    %402 = vmatprep.mubr.bf16.mxu0 0
    %403 = vmatmul.mubr.bf16.gmra.mxu0 %v222
    %v404 = vpop.f32.mrf.mxu0
    %v405 = vadd.f32 0.0, %v404
    %v406 = vpop.f32.mrf.mxu0
    %v407 = vadd.f32 0.0, %v406
    %v408 = vpop.f32.mrf.mxu0
    %v409 = vadd.f32 0.0, %v408
    %v410 = vpop.f32.mrf.mxu0
    %v411 = vadd.f32 0.0, %v410
    %412 = vmatprep.mubr.bf16.mxu0 0
    %413 = vmatmul.mubr.bf16.gmra.mxu0 %v223
    %v414 = vpop.f32.mrf.mxu0
    %v415 = vadd.f32 0.0, %v414
    %v416 = vpop.f32.mrf.mxu0
    %v417 = vadd.f32 0.0, %v416
    %v418 = vpop.f32.mrf.mxu0
    %v419 = vadd.f32 0.0, %v418
    %v420 = vpop.f32.mrf.mxu0
    %v421 = vadd.f32 0.0, %v420
    %422 = vmatprep.mubr.bf16.mxu0 0
    %423 = vmatmul.mubr.bf16.gmra.mxu0 %v224
    %v424 = vpop.f32.mrf.mxu0
    %v425 = vadd.f32 0.0, %v424
    %v426 = vpop.f32.mrf.mxu0
    %v427 = vadd.f32 0.0, %v426
    %v428 = vpop.f32.mrf.mxu0
    %v429 = vadd.f32 0.0, %v428
    %v430 = vpop.f32.mrf.mxu0
    %v431 = vadd.f32 0.0, %v430
    %432 = vmatprep.mubr.bf16.mxu0 0
    %433 = vmatmul.mubr.bf16.gmra.mxu0 %v225
    %v434 = vpop.f32.mrf.mxu0
    %v435 = vadd.f32 0.0, %v434
    %v436 = vpop.f32.mrf.mxu0
    %v437 = vadd.f32 0.0, %v436
    %v438 = vpop.f32.mrf.mxu0
    %v439 = vadd.f32 0.0, %v438
    %v440 = vpop.f32.mrf.mxu0
    %v441 = vadd.f32 0.0, %v440
    %442 = vmatprep.mubr.bf16.mxu0 0
    %443 = vmatmul.mubr.bf16.gmra.mxu0 %v226
    %v444 = vpop.f32.mrf.mxu0
    %v445 = vadd.f32 0.0, %v444
    %v446 = vpop.f32.mrf.mxu0
    %v447 = vadd.f32 0.0, %v446
    %v448 = vpop.f32.mrf.mxu0
    %v449 = vadd.f32 0.0, %v448
    %v450 = vpop.f32.mrf.mxu0
    %v451 = vadd.f32 0.0, %v450
    %452 = vmatprep.mubr.bf16.mxu0 0
    %453 = vmatmul.mubr.bf16.gmra.mxu0 %v227
    %v454 = vpop.f32.mrf.mxu0
    %v455 = vadd.f32 0.0, %v454
    %v456 = vpop.f32.mrf.mxu0
    %v457 = vadd.f32 0.0, %v456
    %v458 = vpop.f32.mrf.mxu0
    %v459 = vadd.f32 0.0, %v458
    %v460 = vpop.f32.mrf.mxu0
    %v461 = vadd.f32 0.0, %v460
    %462 = vmatprep.mubr.bf16.mxu0 0
    %463 = vmatmul.mubr.bf16.gmra.mxu0 %v228
    %v464 = vpop.f32.mrf.mxu0
    %v465 = vadd.f32 0.0, %v464
    %v466 = vpop.f32.mrf.mxu0
    %v467 = vadd.f32 0.0, %v466
    %v468 = vpop.f32.mrf.mxu0
    %v469 = vadd.f32 0.0, %v468
    %v470 = vpop.f32.mrf.mxu0
    %v471 = vadd.f32 0.0, %v470
    %472 = vmatprep.mubr.bf16.mxu0 0
    %473 = vmatmul.mubr.bf16.gmra.mxu0 %v229
    %v474 = vpop.f32.mrf.mxu0
    %v475 = vadd.f32 0.0, %v474
    %v476 = vpop.f32.mrf.mxu0
    %v477 = vadd.f32 0.0, %v476
    %v478 = vpop.f32.mrf.mxu0
    %v479 = vadd.f32 0.0, %v478
    %v480 = vpop.f32.mrf.mxu0
    %v481 = vadd.f32 0.0, %v480
    %482 = vmatprep.mubr.bf16.mxu0 0
    %483 = vmatmul.mubr.bf16.gmra.mxu0 %v230
    %v484 = vpop.f32.mrf.mxu0
    %v485 = vadd.f32 0.0, %v484
    %v486 = vpop.f32.mrf.mxu0
    %v487 = vadd.f32 0.0, %v486
    %v488 = vpop.f32.mrf.mxu0
    %v489 = vadd.f32 0.0, %v488
    %v490 = vpop.f32.mrf.mxu0
    %v491 = vadd.f32 0.0, %v490
    %492 = vmatprep.mubr.bf16.mxu0 0
    %493 = vmatmul.mubr.bf16.gmra.mxu0 %v231
    %v494 = vpop.f32.mrf.mxu0
    %v495 = vadd.f32 0.0, %v494
    %v496 = vpop.f32.mrf.mxu0
    %v497 = vadd.f32 0.0, %v496
    %v498 = vpop.f32.mrf.mxu0
    %v499 = vadd.f32 0.0, %v498
    %v500 = vpop.f32.mrf.mxu0
    %v501 = vadd.f32 0.0, %v500
    %502 = vmatprep.mubr.bf16.mxu0 0
    %503 = vmatmul.mubr.bf16.gmra.mxu0 %v232
    %v504 = vpop.f32.mrf.mxu0
    %v505 = vadd.f32 0.0, %v504
    %v506 = vpop.f32.mrf.mxu0
    %v507 = vadd.f32 0.0, %v506
    %v508 = vpop.f32.mrf.mxu0
    %v509 = vadd.f32 0.0, %v508
    %v510 = vpop.f32.mrf.mxu0
    %v511 = vadd.f32 0.0, %v510
    %512 = vmatprep.mubr.bf16.mxu0 0
    %513 = vmatmul.mubr.bf16.gmra.mxu0 %v233
    %v514 = vpop.f32.mrf.mxu0
    %v515 = vadd.f32 0.0, %v514
    %v516 = vpop.f32.mrf.mxu0
    %v517 = vadd.f32 0.0, %v516
    %v518 = vpop.f32.mrf.mxu0
    %v519 = vadd.f32 0.0, %v518
    %v520 = vpop.f32.mrf.mxu0
    %v521 = vadd.f32 0.0, %v520
    %522 = vdwg.mxu0
    %v523 = vpack.c.bf16 %v369, %v365
    %v524 = vpack.c.bf16 %v379, %v375
    %v525 = vpack.c.bf16 %v389, %v385
    %v526 = vpack.c.bf16 %v399, %v395
    %v527 = vpack.c.bf16 %v409, %v405
    %v528 = vpack.c.bf16 %v419, %v415
    %v529 = vpack.c.bf16 %v429, %v425
    %v530 = vpack.c.bf16 %v439, %v435
    %v531 = vpack.c.bf16 %v449, %v445
    %v532 = vpack.c.bf16 %v459, %v455
    %v533 = vpack.c.bf16 %v469, %v465
    %v534 = vpack.c.bf16 %v479, %v475
    %v535 = vpack.c.bf16 %v489, %v485
    %v536 = vpack.c.bf16 %v499, %v495
    %v537 = vpack.c.bf16 %v509, %v505
    %v538 = vpack.c.bf16 %v519, %v515
    %v541 = vunpack.c.l.b16 %v106
    %v542 = vunpack.c.l.b16 %v107
    %v543 = vpack.c.b16 %v542, %v541
    %vm544 = vcmask 130048
    %v546 = vsel %vm544, %v543, 0
    %548 = vmatprep.subr.bf16.mxu0 0
    %549 = vmatpush1.bf16.msra.mxu0 0
    %550 = vmatprep.subr.bf16.mxu0 0
    %551 = vmatpush1.bf16.msra.mxu0 0
    %552 = vmatprep.subr.bf16.mxu0 0
    %553 = vmatpush1.bf16.msra.mxu0 0
    %554 = vmatprep.subr.bf16.mxu0 0
    %555 = vmatpush1.bf16.msra.mxu0 0
    %556 = vmatprep.subr.bf16.mxu0 0
    %557 = vmatpush1.bf16.msra.mxu0 0
    %558 = vmatprep.subr.bf16.mxu0 0
    %559 = vmatpush1.bf16.msra.mxu0 0
    %560 = vmatprep.subr.bf16.mxu0 0
    %561 = vmatpush1.bf16.msra.mxu0 0
    %562 = vmatprep.subr.bf16.mxu0 0
    %563 = vmatpush1.bf16.msra.mxu0 %v523
    %564 = vmatprep.subr.bf16.mxu0 0
    %565 = vmatpush2.bf16.msra.mxu0 0
    %566 = vmatprep.subr.bf16.mxu0 0
    %567 = vmatpush2.bf16.msra.mxu0 0
    %568 = vmatprep.subr.bf16.mxu0 0
    %569 = vmatpush2.bf16.msra.mxu0 0
    %570 = vmatprep.subr.bf16.mxu0 0
    %571 = vmatpush2.bf16.msra.mxu0 0
    %572 = vmatprep.subr.bf16.mxu0 0
    %573 = vmatpush2.bf16.msra.mxu0 0
    %574 = vmatprep.subr.bf16.mxu0 0
    %575 = vmatpush2.bf16.msra.mxu0 0
    %576 = vmatprep.subr.bf16.mxu0 0
    %577 = vmatpush2.bf16.msra.mxu0 0
    %578 = vmatprep.subr.bf16.mxu0 0
    %579 = vmatpush2.bf16.msra.mxu0 0
    %580 = vmatprep.mubr.bf16.mxu0 0
    %581 = vmatmul.mubr.bf16.gmra.mxu0 %v546
    %v582 = vpop.f32.mrf.mxu0
    %v583 = vadd.f32 0.0, %v582
    %v584 = vpop.f32.mrf.mxu0
    %v585 = vpop.f32.mrf.mxu0
    %v586 = vadd.f32 0.0, %v585
    %v587 = vpop.f32.mrf.mxu0
    %588 = vdwg.mxu0
    %v591 = vunpack.c.l.b16 %v108
    %v592 = vunpack.c.l.b16 %v109
    %v593 = vpack.c.b16 %v592, %v591
    %v595 = vsel %vm544, %v593, 0
    %597 = vmatprep.subr.bf16.mxu0 0
    %598 = vmatpush1.bf16.msra.mxu0 0
    %599 = vmatprep.subr.bf16.mxu0 0
    %600 = vmatpush1.bf16.msra.mxu0 0
    %601 = vmatprep.subr.bf16.mxu0 0
    %602 = vmatpush1.bf16.msra.mxu0 0
    %603 = vmatprep.subr.bf16.mxu0 0
    %604 = vmatpush1.bf16.msra.mxu0 0
    %605 = vmatprep.subr.bf16.mxu0 0
    %606 = vmatpush1.bf16.msra.mxu0 0
    %607 = vmatprep.subr.bf16.mxu0 0
    %608 = vmatpush1.bf16.msra.mxu0 0
    %609 = vmatprep.subr.bf16.mxu0 0
    %610 = vmatpush1.bf16.msra.mxu0 0
    %611 = vmatprep.subr.bf16.mxu0 0
    %612 = vmatpush1.bf16.msra.mxu0 %v524
    %613 = vmatprep.subr.bf16.mxu0 0
    %614 = vmatpush2.bf16.msra.mxu0 0
    %615 = vmatprep.subr.bf16.mxu0 0
    %616 = vmatpush2.bf16.msra.mxu0 0
    %617 = vmatprep.subr.bf16.mxu0 0
    %618 = vmatpush2.bf16.msra.mxu0 0
    %619 = vmatprep.subr.bf16.mxu0 0
    %620 = vmatpush2.bf16.msra.mxu0 0
    %621 = vmatprep.subr.bf16.mxu0 0
    %622 = vmatpush2.bf16.msra.mxu0 0
    %623 = vmatprep.subr.bf16.mxu0 0
    %624 = vmatpush2.bf16.msra.mxu0 0
    %625 = vmatprep.subr.bf16.mxu0 0
    %626 = vmatpush2.bf16.msra.mxu0 0
    %627 = vmatprep.subr.bf16.mxu0 0
    %628 = vmatpush2.bf16.msra.mxu0 0
    %629 = vmatprep.mubr.bf16.mxu0 0
    %630 = vmatmul.mubr.bf16.gmra.mxu0 %v595
    %v631 = vpop.f32.mrf.mxu0
    %v632 = vadd.f32 0.0, %v631
    %v633 = vpop.f32.mrf.mxu0
    %v634 = vpop.f32.mrf.mxu0
    %v635 = vadd.f32 0.0, %v634
    %v636 = vpop.f32.mrf.mxu0
    %637 = vdwg.mxu0
    %v640 = vunpack.c.l.b16 %v110
    %v641 = vunpack.c.l.b16 %v111
    %v642 = vpack.c.b16 %v641, %v640
    %v644 = vsel %vm544, %v642, 0
    %646 = vmatprep.subr.bf16.mxu0 0
    %647 = vmatpush1.bf16.msra.mxu0 0
    %648 = vmatprep.subr.bf16.mxu0 0
    %649 = vmatpush1.bf16.msra.mxu0 0
    %650 = vmatprep.subr.bf16.mxu0 0
    %651 = vmatpush1.bf16.msra.mxu0 0
    %652 = vmatprep.subr.bf16.mxu0 0
    %653 = vmatpush1.bf16.msra.mxu0 0
    %654 = vmatprep.subr.bf16.mxu0 0
    %655 = vmatpush1.bf16.msra.mxu0 0
    %656 = vmatprep.subr.bf16.mxu0 0
    %657 = vmatpush1.bf16.msra.mxu0 0
    %658 = vmatprep.subr.bf16.mxu0 0
    %659 = vmatpush1.bf16.msra.mxu0 0
    %660 = vmatprep.subr.bf16.mxu0 0
    %661 = vmatpush1.bf16.msra.mxu0 %v525
    %662 = vmatprep.subr.bf16.mxu0 0
    %663 = vmatpush2.bf16.msra.mxu0 0
    %664 = vmatprep.subr.bf16.mxu0 0
    %665 = vmatpush2.bf16.msra.mxu0 0
    %666 = vmatprep.subr.bf16.mxu0 0
    %667 = vmatpush2.bf16.msra.mxu0 0
    %668 = vmatprep.subr.bf16.mxu0 0
    %669 = vmatpush2.bf16.msra.mxu0 0
    %670 = vmatprep.subr.bf16.mxu0 0
    %671 = vmatpush2.bf16.msra.mxu0 0
    %672 = vmatprep.subr.bf16.mxu0 0
    %673 = vmatpush2.bf16.msra.mxu0 0
    %674 = vmatprep.subr.bf16.mxu0 0
    %675 = vmatpush2.bf16.msra.mxu0 0
    %676 = vmatprep.subr.bf16.mxu0 0
    %677 = vmatpush2.bf16.msra.mxu0 0
    %678 = vmatprep.mubr.bf16.mxu0 0
    %679 = vmatmul.mubr.bf16.gmra.mxu0 %v644
    %v680 = vpop.f32.mrf.mxu0
    %v681 = vadd.f32 0.0, %v680
    %v682 = vpop.f32.mrf.mxu0
    %v683 = vpop.f32.mrf.mxu0
    %v684 = vadd.f32 0.0, %v683
    %v685 = vpop.f32.mrf.mxu0
    %686 = vdwg.mxu0
    %v689 = vunpack.c.l.b16 %v112
    %v690 = vunpack.c.l.b16 %v113
    %v691 = vpack.c.b16 %v690, %v689
    %v693 = vsel %vm544, %v691, 0
    %695 = vmatprep.subr.bf16.mxu0 0
    %696 = vmatpush1.bf16.msra.mxu0 0
    %697 = vmatprep.subr.bf16.mxu0 0
    %698 = vmatpush1.bf16.msra.mxu0 0
    %699 = vmatprep.subr.bf16.mxu0 0
    %700 = vmatpush1.bf16.msra.mxu0 0
    %701 = vmatprep.subr.bf16.mxu0 0
    %702 = vmatpush1.bf16.msra.mxu0 0
    %703 = vmatprep.subr.bf16.mxu0 0
    %704 = vmatpush1.bf16.msra.mxu0 0
    %705 = vmatprep.subr.bf16.mxu0 0
    %706 = vmatpush1.bf16.msra.mxu0 0
    %707 = vmatprep.subr.bf16.mxu0 0
    %708 = vmatpush1.bf16.msra.mxu0 0
    %709 = vmatprep.subr.bf16.mxu0 0
    %710 = vmatpush1.bf16.msra.mxu0 %v526
    %711 = vmatprep.subr.bf16.mxu0 0
    %712 = vmatpush2.bf16.msra.mxu0 0
    %713 = vmatprep.subr.bf16.mxu0 0
    %714 = vmatpush2.bf16.msra.mxu0 0
    %715 = vmatprep.subr.bf16.mxu0 0
    %716 = vmatpush2.bf16.msra.mxu0 0
    %717 = vmatprep.subr.bf16.mxu0 0
    %718 = vmatpush2.bf16.msra.mxu0 0
    %719 = vmatprep.subr.bf16.mxu0 0
    %720 = vmatpush2.bf16.msra.mxu0 0
    %721 = vmatprep.subr.bf16.mxu0 0
    %722 = vmatpush2.bf16.msra.mxu0 0
    %723 = vmatprep.subr.bf16.mxu0 0
    %724 = vmatpush2.bf16.msra.mxu0 0
    %725 = vmatprep.subr.bf16.mxu0 0
    %726 = vmatpush2.bf16.msra.mxu0 0
    %727 = vmatprep.mubr.bf16.mxu0 0
    %728 = vmatmul.mubr.bf16.gmra.mxu0 %v693
    %v729 = vpop.f32.mrf.mxu0
    %v730 = vadd.f32 0.0, %v729
    %v731 = vpop.f32.mrf.mxu0
    %v732 = vpop.f32.mrf.mxu0
    %v733 = vadd.f32 0.0, %v732
    %v734 = vpop.f32.mrf.mxu0
    %735 = vdwg.mxu0
    %v738 = vunpack.c.l.b16 %v114
    %v739 = vunpack.c.l.b16 %v115
    %v740 = vpack.c.b16 %v739, %v738
    %v742 = vsel %vm544, %v740, 0
    %744 = vmatprep.subr.bf16.mxu0 0
    %745 = vmatpush1.bf16.msra.mxu0 0
    %746 = vmatprep.subr.bf16.mxu0 0
    %747 = vmatpush1.bf16.msra.mxu0 0
    %748 = vmatprep.subr.bf16.mxu0 0
    %749 = vmatpush1.bf16.msra.mxu0 0
    %750 = vmatprep.subr.bf16.mxu0 0
    %751 = vmatpush1.bf16.msra.mxu0 0
    %752 = vmatprep.subr.bf16.mxu0 0
    %753 = vmatpush1.bf16.msra.mxu0 0
    %754 = vmatprep.subr.bf16.mxu0 0
    %755 = vmatpush1.bf16.msra.mxu0 0
    %756 = vmatprep.subr.bf16.mxu0 0
    %757 = vmatpush1.bf16.msra.mxu0 0
    %758 = vmatprep.subr.bf16.mxu0 0
    %759 = vmatpush1.bf16.msra.mxu0 %v527
    %760 = vmatprep.subr.bf16.mxu0 0
    %761 = vmatpush2.bf16.msra.mxu0 0
    %762 = vmatprep.subr.bf16.mxu0 0
    %763 = vmatpush2.bf16.msra.mxu0 0
    %764 = vmatprep.subr.bf16.mxu0 0
    %765 = vmatpush2.bf16.msra.mxu0 0
    %766 = vmatprep.subr.bf16.mxu0 0
    %767 = vmatpush2.bf16.msra.mxu0 0
    %768 = vmatprep.subr.bf16.mxu0 0
    %769 = vmatpush2.bf16.msra.mxu0 0
    %770 = vmatprep.subr.bf16.mxu0 0
    %771 = vmatpush2.bf16.msra.mxu0 0
    %772 = vmatprep.subr.bf16.mxu0 0
    %773 = vmatpush2.bf16.msra.mxu0 0
    %774 = vmatprep.subr.bf16.mxu0 0
    %775 = vmatpush2.bf16.msra.mxu0 0
    %776 = vmatprep.mubr.bf16.mxu0 0
    %777 = vmatmul.mubr.bf16.gmra.mxu0 %v742
    %v778 = vpop.f32.mrf.mxu0
    %v779 = vadd.f32 0.0, %v778
    %v780 = vpop.f32.mrf.mxu0
    %v781 = vpop.f32.mrf.mxu0
    %v782 = vadd.f32 0.0, %v781
    %v783 = vpop.f32.mrf.mxu0
    %784 = vdwg.mxu0
    %v787 = vunpack.c.l.b16 %v116
    %v788 = vunpack.c.l.b16 %v117
    %v789 = vpack.c.b16 %v788, %v787
    %v791 = vsel %vm544, %v789, 0
    %793 = vmatprep.subr.bf16.mxu0 0
    %794 = vmatpush1.bf16.msra.mxu0 0
    %795 = vmatprep.subr.bf16.mxu0 0
    %796 = vmatpush1.bf16.msra.mxu0 0
    %797 = vmatprep.subr.bf16.mxu0 0
    %798 = vmatpush1.bf16.msra.mxu0 0
    %799 = vmatprep.subr.bf16.mxu0 0
    %800 = vmatpush1.bf16.msra.mxu0 0
    %801 = vmatprep.subr.bf16.mxu0 0
    %802 = vmatpush1.bf16.msra.mxu0 0
    %803 = vmatprep.subr.bf16.mxu0 0
    %804 = vmatpush1.bf16.msra.mxu0 0
    %805 = vmatprep.subr.bf16.mxu0 0
    %806 = vmatpush1.bf16.msra.mxu0 0
    %807 = vmatprep.subr.bf16.mxu0 0
    %808 = vmatpush1.bf16.msra.mxu0 %v528
    %809 = vmatprep.subr.bf16.mxu0 0
    %810 = vmatpush2.bf16.msra.mxu0 0
    %811 = vmatprep.subr.bf16.mxu0 0
    %812 = vmatpush2.bf16.msra.mxu0 0
    %813 = vmatprep.subr.bf16.mxu0 0
    %814 = vmatpush2.bf16.msra.mxu0 0
    %815 = vmatprep.subr.bf16.mxu0 0
    %816 = vmatpush2.bf16.msra.mxu0 0
    %817 = vmatprep.subr.bf16.mxu0 0
    %818 = vmatpush2.bf16.msra.mxu0 0
    %819 = vmatprep.subr.bf16.mxu0 0
    %820 = vmatpush2.bf16.msra.mxu0 0
    %821 = vmatprep.subr.bf16.mxu0 0
    %822 = vmatpush2.bf16.msra.mxu0 0
    %823 = vmatprep.subr.bf16.mxu0 0
    %824 = vmatpush2.bf16.msra.mxu0 0
    %825 = vmatprep.mubr.bf16.mxu0 0
    %826 = vmatmul.mubr.bf16.gmra.mxu0 %v791
    %v827 = vpop.f32.mrf.mxu0
    %v828 = vadd.f32 0.0, %v827
    %v829 = vpop.f32.mrf.mxu0
    %v830 = vpop.f32.mrf.mxu0
    %v831 = vadd.f32 0.0, %v830
    %v832 = vpop.f32.mrf.mxu0
    %833 = vdwg.mxu0
    %v836 = vunpack.c.l.b16 %v118
    %v837 = vunpack.c.l.b16 %v119
    %v838 = vpack.c.b16 %v837, %v836
    %v840 = vsel %vm544, %v838, 0
    %842 = vmatprep.subr.bf16.mxu0 0
    %843 = vmatpush1.bf16.msra.mxu0 0
    %844 = vmatprep.subr.bf16.mxu0 0
    %845 = vmatpush1.bf16.msra.mxu0 0
    %846 = vmatprep.subr.bf16.mxu0 0
    %847 = vmatpush1.bf16.msra.mxu0 0
    %848 = vmatprep.subr.bf16.mxu0 0
    %849 = vmatpush1.bf16.msra.mxu0 0
    %850 = vmatprep.subr.bf16.mxu0 0
    %851 = vmatpush1.bf16.msra.mxu0 0
    %852 = vmatprep.subr.bf16.mxu0 0
    %853 = vmatpush1.bf16.msra.mxu0 0
    %854 = vmatprep.subr.bf16.mxu0 0
    %855 = vmatpush1.bf16.msra.mxu0 0
    %856 = vmatprep.subr.bf16.mxu0 0
    %857 = vmatpush1.bf16.msra.mxu0 %v529
    %858 = vmatprep.subr.bf16.mxu0 0
    %859 = vmatpush2.bf16.msra.mxu0 0
    %860 = vmatprep.subr.bf16.mxu0 0
    %861 = vmatpush2.bf16.msra.mxu0 0
    %862 = vmatprep.subr.bf16.mxu0 0
    %863 = vmatpush2.bf16.msra.mxu0 0
    %864 = vmatprep.subr.bf16.mxu0 0
    %865 = vmatpush2.bf16.msra.mxu0 0
    %866 = vmatprep.subr.bf16.mxu0 0
    %867 = vmatpush2.bf16.msra.mxu0 0
    %868 = vmatprep.subr.bf16.mxu0 0
    %869 = vmatpush2.bf16.msra.mxu0 0
    %870 = vmatprep.subr.bf16.mxu0 0
    %871 = vmatpush2.bf16.msra.mxu0 0
    %872 = vmatprep.subr.bf16.mxu0 0
    %873 = vmatpush2.bf16.msra.mxu0 0
    %874 = vmatprep.mubr.bf16.mxu0 0
    %875 = vmatmul.mubr.bf16.gmra.mxu0 %v840
    %v876 = vpop.f32.mrf.mxu0
    %v877 = vadd.f32 0.0, %v876
    %v878 = vpop.f32.mrf.mxu0
    %v879 = vpop.f32.mrf.mxu0
    %v880 = vadd.f32 0.0, %v879
    %v881 = vpop.f32.mrf.mxu0
    %882 = vdwg.mxu0
    %v885 = vunpack.c.l.b16 %v120
    %v886 = vunpack.c.l.b16 %v121
    %v887 = vpack.c.b16 %v886, %v885
    %v889 = vsel %vm544, %v887, 0
    %891 = vmatprep.subr.bf16.mxu0 0
    %892 = vmatpush1.bf16.msra.mxu0 0
    %893 = vmatprep.subr.bf16.mxu0 0
    %894 = vmatpush1.bf16.msra.mxu0 0
    %895 = vmatprep.subr.bf16.mxu0 0
    %896 = vmatpush1.bf16.msra.mxu0 0
    %897 = vmatprep.subr.bf16.mxu0 0
    %898 = vmatpush1.bf16.msra.mxu0 0
    %899 = vmatprep.subr.bf16.mxu0 0
    %900 = vmatpush1.bf16.msra.mxu0 0
    %901 = vmatprep.subr.bf16.mxu0 0
    %902 = vmatpush1.bf16.msra.mxu0 0
    %903 = vmatprep.subr.bf16.mxu0 0
    %904 = vmatpush1.bf16.msra.mxu0 0
    %905 = vmatprep.subr.bf16.mxu0 0
    %906 = vmatpush1.bf16.msra.mxu0 %v530
    %907 = vmatprep.subr.bf16.mxu0 0
    %908 = vmatpush2.bf16.msra.mxu0 0
    %909 = vmatprep.subr.bf16.mxu0 0
    %910 = vmatpush2.bf16.msra.mxu0 0
    %911 = vmatprep.subr.bf16.mxu0 0
    %912 = vmatpush2.bf16.msra.mxu0 0
    %913 = vmatprep.subr.bf16.mxu0 0
    %914 = vmatpush2.bf16.msra.mxu0 0
    %915 = vmatprep.subr.bf16.mxu0 0
    %916 = vmatpush2.bf16.msra.mxu0 0
    %917 = vmatprep.subr.bf16.mxu0 0
    %918 = vmatpush2.bf16.msra.mxu0 0
    %919 = vmatprep.subr.bf16.mxu0 0
    %920 = vmatpush2.bf16.msra.mxu0 0
    %921 = vmatprep.subr.bf16.mxu0 0
    %922 = vmatpush2.bf16.msra.mxu0 0
    %923 = vmatprep.mubr.bf16.mxu0 0
    %924 = vmatmul.mubr.bf16.gmra.mxu0 %v889
    %v925 = vpop.f32.mrf.mxu0
    %v926 = vadd.f32 0.0, %v925
    %v927 = vpop.f32.mrf.mxu0
    %v928 = vpop.f32.mrf.mxu0
    %v929 = vadd.f32 0.0, %v928
    %v930 = vpop.f32.mrf.mxu0
    %931 = vdwg.mxu0
    %v934 = vunpack.c.l.b16 %v122
    %v935 = vunpack.c.l.b16 %v123
    %v936 = vpack.c.b16 %v935, %v934
    %v938 = vsel %vm544, %v936, 0
    %940 = vmatprep.subr.bf16.mxu0 0
    %941 = vmatpush1.bf16.msra.mxu0 0
    %942 = vmatprep.subr.bf16.mxu0 0
    %943 = vmatpush1.bf16.msra.mxu0 0
    %944 = vmatprep.subr.bf16.mxu0 0
    %945 = vmatpush1.bf16.msra.mxu0 0
    %946 = vmatprep.subr.bf16.mxu0 0
    %947 = vmatpush1.bf16.msra.mxu0 0
    %948 = vmatprep.subr.bf16.mxu0 0
    %949 = vmatpush1.bf16.msra.mxu0 0
    %950 = vmatprep.subr.bf16.mxu0 0
    %951 = vmatpush1.bf16.msra.mxu0 0
    %952 = vmatprep.subr.bf16.mxu0 0
    %953 = vmatpush1.bf16.msra.mxu0 0
    %954 = vmatprep.subr.bf16.mxu0 0
    %955 = vmatpush1.bf16.msra.mxu0 %v531
    %956 = vmatprep.subr.bf16.mxu0 0
    %957 = vmatpush2.bf16.msra.mxu0 0
    %958 = vmatprep.subr.bf16.mxu0 0
    %959 = vmatpush2.bf16.msra.mxu0 0
    %960 = vmatprep.subr.bf16.mxu0 0
    %961 = vmatpush2.bf16.msra.mxu0 0
    %962 = vmatprep.subr.bf16.mxu0 0
    %963 = vmatpush2.bf16.msra.mxu0 0
    %964 = vmatprep.subr.bf16.mxu0 0
    %965 = vmatpush2.bf16.msra.mxu0 0
    %966 = vmatprep.subr.bf16.mxu0 0
    %967 = vmatpush2.bf16.msra.mxu0 0
    %968 = vmatprep.subr.bf16.mxu0 0
    %969 = vmatpush2.bf16.msra.mxu0 0
    %970 = vmatprep.subr.bf16.mxu0 0
    %971 = vmatpush2.bf16.msra.mxu0 0
    %972 = vmatprep.mubr.bf16.mxu0 0
    %973 = vmatmul.mubr.bf16.gmra.mxu0 %v938
    %v974 = vpop.f32.mrf.mxu0
    %v975 = vadd.f32 0.0, %v974
    %v976 = vpop.f32.mrf.mxu0
    %v977 = vpop.f32.mrf.mxu0
    %v978 = vadd.f32 0.0, %v977
    %v979 = vpop.f32.mrf.mxu0
    %980 = vdwg.mxu0
    %v983 = vunpack.c.l.b16 %v124
    %v984 = vunpack.c.l.b16 %v125
    %v985 = vpack.c.b16 %v984, %v983
    %v987 = vsel %vm544, %v985, 0
    %989 = vmatprep.subr.bf16.mxu0 0
    %990 = vmatpush1.bf16.msra.mxu0 0
    %991 = vmatprep.subr.bf16.mxu0 0
    %992 = vmatpush1.bf16.msra.mxu0 0
    %993 = vmatprep.subr.bf16.mxu0 0
    %994 = vmatpush1.bf16.msra.mxu0 0
    %995 = vmatprep.subr.bf16.mxu0 0
    %996 = vmatpush1.bf16.msra.mxu0 0
    %997 = vmatprep.subr.bf16.mxu0 0
    %998 = vmatpush1.bf16.msra.mxu0 0
    %999 = vmatprep.subr.bf16.mxu0 0
    %1000 = vmatpush1.bf16.msra.mxu0 0
    %1001 = vmatprep.subr.bf16.mxu0 0
    %1002 = vmatpush1.bf16.msra.mxu0 0
    %1003 = vmatprep.subr.bf16.mxu0 0
    %1004 = vmatpush1.bf16.msra.mxu0 %v532
    %1005 = vmatprep.subr.bf16.mxu0 0
    %1006 = vmatpush2.bf16.msra.mxu0 0
    %1007 = vmatprep.subr.bf16.mxu0 0
    %1008 = vmatpush2.bf16.msra.mxu0 0
    %1009 = vmatprep.subr.bf16.mxu0 0
    %1010 = vmatpush2.bf16.msra.mxu0 0
    %1011 = vmatprep.subr.bf16.mxu0 0
    %1012 = vmatpush2.bf16.msra.mxu0 0
    %1013 = vmatprep.subr.bf16.mxu0 0
    %1014 = vmatpush2.bf16.msra.mxu0 0
    %1015 = vmatprep.subr.bf16.mxu0 0
    %1016 = vmatpush2.bf16.msra.mxu0 0
    %1017 = vmatprep.subr.bf16.mxu0 0
    %1018 = vmatpush2.bf16.msra.mxu0 0
    %1019 = vmatprep.subr.bf16.mxu0 0
    %1020 = vmatpush2.bf16.msra.mxu0 0
    %1021 = vmatprep.mubr.bf16.mxu0 0
    %1022 = vmatmul.mubr.bf16.gmra.mxu0 %v987
    %v1023 = vpop.f32.mrf.mxu0
    %v1024 = vadd.f32 0.0, %v1023
    %v1025 = vpop.f32.mrf.mxu0
    %v1026 = vpop.f32.mrf.mxu0
    %v1027 = vadd.f32 0.0, %v1026
    %v1028 = vpop.f32.mrf.mxu0
    %1029 = vdwg.mxu0
    %v1032 = vunpack.c.l.b16 %v126
    %v1033 = vunpack.c.l.b16 %v127
    %v1034 = vpack.c.b16 %v1033, %v1032
    %v1036 = vsel %vm544, %v1034, 0
    %1038 = vmatprep.subr.bf16.mxu0 0
    %1039 = vmatpush1.bf16.msra.mxu0 0
    %1040 = vmatprep.subr.bf16.mxu0 0
    %1041 = vmatpush1.bf16.msra.mxu0 0
    %1042 = vmatprep.subr.bf16.mxu0 0
    %1043 = vmatpush1.bf16.msra.mxu0 0
    %1044 = vmatprep.subr.bf16.mxu0 0
    %1045 = vmatpush1.bf16.msra.mxu0 0
    %1046 = vmatprep.subr.bf16.mxu0 0
    %1047 = vmatpush1.bf16.msra.mxu0 0
    %1048 = vmatprep.subr.bf16.mxu0 0
    %1049 = vmatpush1.bf16.msra.mxu0 0
    %1050 = vmatprep.subr.bf16.mxu0 0
    %1051 = vmatpush1.bf16.msra.mxu0 0
    %1052 = vmatprep.subr.bf16.mxu0 0
    %1053 = vmatpush1.bf16.msra.mxu0 %v533
    %1054 = vmatprep.subr.bf16.mxu0 0
    %1055 = vmatpush2.bf16.msra.mxu0 0
    %1056 = vmatprep.subr.bf16.mxu0 0
    %1057 = vmatpush2.bf16.msra.mxu0 0
    %1058 = vmatprep.subr.bf16.mxu0 0
    %1059 = vmatpush2.bf16.msra.mxu0 0
    %1060 = vmatprep.subr.bf16.mxu0 0
    %1061 = vmatpush2.bf16.msra.mxu0 0
    %1062 = vmatprep.subr.bf16.mxu0 0
    %1063 = vmatpush2.bf16.msra.mxu0 0
    %1064 = vmatprep.subr.bf16.mxu0 0
    %1065 = vmatpush2.bf16.msra.mxu0 0
    %1066 = vmatprep.subr.bf16.mxu0 0
    %1067 = vmatpush2.bf16.msra.mxu0 0
    %1068 = vmatprep.subr.bf16.mxu0 0
    %1069 = vmatpush2.bf16.msra.mxu0 0
    %1070 = vmatprep.mubr.bf16.mxu0 0
    %1071 = vmatmul.mubr.bf16.gmra.mxu0 %v1036
    %v1072 = vpop.f32.mrf.mxu0
    %v1073 = vadd.f32 0.0, %v1072
    %v1074 = vpop.f32.mrf.mxu0
    %v1075 = vpop.f32.mrf.mxu0
    %v1076 = vadd.f32 0.0, %v1075
    %v1077 = vpop.f32.mrf.mxu0
    %1078 = vdwg.mxu0
    %v1081 = vunpack.c.l.b16 %v128
    %v1082 = vunpack.c.l.b16 %v129
    %v1083 = vpack.c.b16 %v1082, %v1081
    %v1085 = vsel %vm544, %v1083, 0
    %1087 = vmatprep.subr.bf16.mxu0 0
    %1088 = vmatpush1.bf16.msra.mxu0 0
    %1089 = vmatprep.subr.bf16.mxu0 0
    %1090 = vmatpush1.bf16.msra.mxu0 0
    %1091 = vmatprep.subr.bf16.mxu0 0
    %1092 = vmatpush1.bf16.msra.mxu0 0
    %1093 = vmatprep.subr.bf16.mxu0 0
    %1094 = vmatpush1.bf16.msra.mxu0 0
    %1095 = vmatprep.subr.bf16.mxu0 0
    %1096 = vmatpush1.bf16.msra.mxu0 0
    %1097 = vmatprep.subr.bf16.mxu0 0
    %1098 = vmatpush1.bf16.msra.mxu0 0
    %1099 = vmatprep.subr.bf16.mxu0 0
    %1100 = vmatpush1.bf16.msra.mxu0 0
    %1101 = vmatprep.subr.bf16.mxu0 0
    %1102 = vmatpush1.bf16.msra.mxu0 %v534
    %1103 = vmatprep.subr.bf16.mxu0 0
    %1104 = vmatpush2.bf16.msra.mxu0 0
    %1105 = vmatprep.subr.bf16.mxu0 0
    %1106 = vmatpush2.bf16.msra.mxu0 0
    %1107 = vmatprep.subr.bf16.mxu0 0
    %1108 = vmatpush2.bf16.msra.mxu0 0
    %1109 = vmatprep.subr.bf16.mxu0 0
    %1110 = vmatpush2.bf16.msra.mxu0 0
    %1111 = vmatprep.subr.bf16.mxu0 0
    %1112 = vmatpush2.bf16.msra.mxu0 0
    %1113 = vmatprep.subr.bf16.mxu0 0
    %1114 = vmatpush2.bf16.msra.mxu0 0
    %1115 = vmatprep.subr.bf16.mxu0 0
    %1116 = vmatpush2.bf16.msra.mxu0 0
    %1117 = vmatprep.subr.bf16.mxu0 0
    %1118 = vmatpush2.bf16.msra.mxu0 0
    %1119 = vmatprep.mubr.bf16.mxu0 0
    %1120 = vmatmul.mubr.bf16.gmra.mxu0 %v1085
    %v1121 = vpop.f32.mrf.mxu0
    %v1122 = vadd.f32 0.0, %v1121
    %v1123 = vpop.f32.mrf.mxu0
    %v1124 = vpop.f32.mrf.mxu0
    %v1125 = vadd.f32 0.0, %v1124
    %v1126 = vpop.f32.mrf.mxu0
    %1127 = vdwg.mxu0
    %v1130 = vunpack.c.l.b16 %v130
    %v1131 = vunpack.c.l.b16 %v131
    %v1132 = vpack.c.b16 %v1131, %v1130
    %v1134 = vsel %vm544, %v1132, 0
    %1136 = vmatprep.subr.bf16.mxu0 0
    %1137 = vmatpush1.bf16.msra.mxu0 0
    %1138 = vmatprep.subr.bf16.mxu0 0
    %1139 = vmatpush1.bf16.msra.mxu0 0
    %1140 = vmatprep.subr.bf16.mxu0 0
    %1141 = vmatpush1.bf16.msra.mxu0 0
    %1142 = vmatprep.subr.bf16.mxu0 0
    %1143 = vmatpush1.bf16.msra.mxu0 0
    %1144 = vmatprep.subr.bf16.mxu0 0
    %1145 = vmatpush1.bf16.msra.mxu0 0
    %1146 = vmatprep.subr.bf16.mxu0 0
    %1147 = vmatpush1.bf16.msra.mxu0 0
    %1148 = vmatprep.subr.bf16.mxu0 0
    %1149 = vmatpush1.bf16.msra.mxu0 0
    %1150 = vmatprep.subr.bf16.mxu0 0
    %1151 = vmatpush1.bf16.msra.mxu0 %v535
    %1152 = vmatprep.subr.bf16.mxu0 0
    %1153 = vmatpush2.bf16.msra.mxu0 0
    %1154 = vmatprep.subr.bf16.mxu0 0
    %1155 = vmatpush2.bf16.msra.mxu0 0
    %1156 = vmatprep.subr.bf16.mxu0 0
    %1157 = vmatpush2.bf16.msra.mxu0 0
    %1158 = vmatprep.subr.bf16.mxu0 0
    %1159 = vmatpush2.bf16.msra.mxu0 0
    %1160 = vmatprep.subr.bf16.mxu0 0
    %1161 = vmatpush2.bf16.msra.mxu0 0
    %1162 = vmatprep.subr.bf16.mxu0 0
    %1163 = vmatpush2.bf16.msra.mxu0 0
    %1164 = vmatprep.subr.bf16.mxu0 0
    %1165 = vmatpush2.bf16.msra.mxu0 0
    %1166 = vmatprep.subr.bf16.mxu0 0
    %1167 = vmatpush2.bf16.msra.mxu0 0
    %1168 = vmatprep.mubr.bf16.mxu0 0
    %1169 = vmatmul.mubr.bf16.gmra.mxu0 %v1134
    %v1170 = vpop.f32.mrf.mxu0
    %v1171 = vadd.f32 0.0, %v1170
    %v1172 = vpop.f32.mrf.mxu0
    %v1173 = vpop.f32.mrf.mxu0
    %v1174 = vadd.f32 0.0, %v1173
    %v1175 = vpop.f32.mrf.mxu0
    %1176 = vdwg.mxu0
    %v1179 = vunpack.c.l.b16 %v132
    %v1180 = vunpack.c.l.b16 %v133
    %v1181 = vpack.c.b16 %v1180, %v1179
    %v1183 = vsel %vm544, %v1181, 0
    %1185 = vmatprep.subr.bf16.mxu0 0
    %1186 = vmatpush1.bf16.msra.mxu0 0
    %1187 = vmatprep.subr.bf16.mxu0 0
    %1188 = vmatpush1.bf16.msra.mxu0 0
    %1189 = vmatprep.subr.bf16.mxu0 0
    %1190 = vmatpush1.bf16.msra.mxu0 0
    %1191 = vmatprep.subr.bf16.mxu0 0
    %1192 = vmatpush1.bf16.msra.mxu0 0
    %1193 = vmatprep.subr.bf16.mxu0 0
    %1194 = vmatpush1.bf16.msra.mxu0 0
    %1195 = vmatprep.subr.bf16.mxu0 0
    %1196 = vmatpush1.bf16.msra.mxu0 0
    %1197 = vmatprep.subr.bf16.mxu0 0
    %1198 = vmatpush1.bf16.msra.mxu0 0
    %1199 = vmatprep.subr.bf16.mxu0 0
    %1200 = vmatpush1.bf16.msra.mxu0 %v536
    %1201 = vmatprep.subr.bf16.mxu0 0
    %1202 = vmatpush2.bf16.msra.mxu0 0
    %1203 = vmatprep.subr.bf16.mxu0 0
    %1204 = vmatpush2.bf16.msra.mxu0 0
    %1205 = vmatprep.subr.bf16.mxu0 0
    %1206 = vmatpush2.bf16.msra.mxu0 0
    %1207 = vmatprep.subr.bf16.mxu0 0
    %1208 = vmatpush2.bf16.msra.mxu0 0
    %1209 = vmatprep.subr.bf16.mxu0 0
    %1210 = vmatpush2.bf16.msra.mxu0 0
    %1211 = vmatprep.subr.bf16.mxu0 0
    %1212 = vmatpush2.bf16.msra.mxu0 0
    %1213 = vmatprep.subr.bf16.mxu0 0
    %1214 = vmatpush2.bf16.msra.mxu0 0
    %1215 = vmatprep.subr.bf16.mxu0 0
    %1216 = vmatpush2.bf16.msra.mxu0 0
    %1217 = vmatprep.mubr.bf16.mxu0 0
    %1218 = vmatmul.mubr.bf16.gmra.mxu0 %v1183
    %v1219 = vpop.f32.mrf.mxu0
    %v1220 = vadd.f32 0.0, %v1219
    %v1221 = vpop.f32.mrf.mxu0
    %v1222 = vpop.f32.mrf.mxu0
    %v1223 = vadd.f32 0.0, %v1222
    %v1224 = vpop.f32.mrf.mxu0
    %1225 = vdwg.mxu0
    %v1228 = vunpack.c.l.b16 %v134
    %v1229 = vunpack.c.l.b16 %v135
    %v1230 = vpack.c.b16 %v1229, %v1228
    %v1232 = vsel %vm544, %v1230, 0
    %1234 = vmatprep.subr.bf16.mxu0 0
    %1235 = vmatpush1.bf16.msra.mxu0 0
    %1236 = vmatprep.subr.bf16.mxu0 0
    %1237 = vmatpush1.bf16.msra.mxu0 0
    %1238 = vmatprep.subr.bf16.mxu0 0
    %1239 = vmatpush1.bf16.msra.mxu0 0
    %1240 = vmatprep.subr.bf16.mxu0 0
    %1241 = vmatpush1.bf16.msra.mxu0 0
    %1242 = vmatprep.subr.bf16.mxu0 0
    %1243 = vmatpush1.bf16.msra.mxu0 0
    %1244 = vmatprep.subr.bf16.mxu0 0
    %1245 = vmatpush1.bf16.msra.mxu0 0
    %1246 = vmatprep.subr.bf16.mxu0 0
    %1247 = vmatpush1.bf16.msra.mxu0 0
    %1248 = vmatprep.subr.bf16.mxu0 0
    %1249 = vmatpush1.bf16.msra.mxu0 %v537
    %1250 = vmatprep.subr.bf16.mxu0 0
    %1251 = vmatpush2.bf16.msra.mxu0 0
    %1252 = vmatprep.subr.bf16.mxu0 0
    %1253 = vmatpush2.bf16.msra.mxu0 0
    %1254 = vmatprep.subr.bf16.mxu0 0
    %1255 = vmatpush2.bf16.msra.mxu0 0
    %1256 = vmatprep.subr.bf16.mxu0 0
    %1257 = vmatpush2.bf16.msra.mxu0 0
    %1258 = vmatprep.subr.bf16.mxu0 0
    %1259 = vmatpush2.bf16.msra.mxu0 0
    %1260 = vmatprep.subr.bf16.mxu0 0
    %1261 = vmatpush2.bf16.msra.mxu0 0
    %1262 = vmatprep.subr.bf16.mxu0 0
    %1263 = vmatpush2.bf16.msra.mxu0 0
    %1264 = vmatprep.subr.bf16.mxu0 0
    %1265 = vmatpush2.bf16.msra.mxu0 0
    %1266 = vmatprep.mubr.bf16.mxu0 0
    %1267 = vmatmul.mubr.bf16.gmra.mxu0 %v1232
    %v1268 = vpop.f32.mrf.mxu0
    %v1269 = vadd.f32 0.0, %v1268
    %v1270 = vpop.f32.mrf.mxu0
    %v1271 = vpop.f32.mrf.mxu0
    %v1272 = vadd.f32 0.0, %v1271
    %v1273 = vpop.f32.mrf.mxu0
    %1274 = vdwg.mxu0
    %v1277 = vunpack.c.l.b16 %v136
    %v1278 = vunpack.c.l.b16 %v137
    %v1279 = vpack.c.b16 %v1278, %v1277
    %v1281 = vsel %vm544, %v1279, 0
    %1283 = vmatprep.subr.bf16.mxu0 0
    %1284 = vmatpush1.bf16.msra.mxu0 0
    %1285 = vmatprep.subr.bf16.mxu0 0
    %1286 = vmatpush1.bf16.msra.mxu0 0
    %1287 = vmatprep.subr.bf16.mxu0 0
    %1288 = vmatpush1.bf16.msra.mxu0 0
    %1289 = vmatprep.subr.bf16.mxu0 0
    %1290 = vmatpush1.bf16.msra.mxu0 0
    %1291 = vmatprep.subr.bf16.mxu0 0
    %1292 = vmatpush1.bf16.msra.mxu0 0
    %1293 = vmatprep.subr.bf16.mxu0 0
    %1294 = vmatpush1.bf16.msra.mxu0 0
    %1295 = vmatprep.subr.bf16.mxu0 0
    %1296 = vmatpush1.bf16.msra.mxu0 0
    %1297 = vmatprep.subr.bf16.mxu0 0
    %1298 = vmatpush1.bf16.msra.mxu0 %v538
    %1299 = vmatprep.subr.bf16.mxu0 0
    %1300 = vmatpush2.bf16.msra.mxu0 0
    %1301 = vmatprep.subr.bf16.mxu0 0
    %1302 = vmatpush2.bf16.msra.mxu0 0
    %1303 = vmatprep.subr.bf16.mxu0 0
    %1304 = vmatpush2.bf16.msra.mxu0 0
    %1305 = vmatprep.subr.bf16.mxu0 0
    %1306 = vmatpush2.bf16.msra.mxu0 0
    %1307 = vmatprep.subr.bf16.mxu0 0
    %1308 = vmatpush2.bf16.msra.mxu0 0
    %1309 = vmatprep.subr.bf16.mxu0 0
    %1310 = vmatpush2.bf16.msra.mxu0 0
    %1311 = vmatprep.subr.bf16.mxu0 0
    %1312 = vmatpush2.bf16.msra.mxu0 0
    %1313 = vmatprep.subr.bf16.mxu0 0
    %1314 = vmatpush2.bf16.msra.mxu0 0
    %1315 = vmatprep.mubr.bf16.mxu0 0
    %1316 = vmatmul.mubr.bf16.gmra.mxu0 %v1281
    %v1317 = vpop.f32.mrf.mxu0
    %v1318 = vadd.f32 0.0, %v1317
    %v1319 = vpop.f32.mrf.mxu0
    %v1320 = vpop.f32.mrf.mxu0
    %v1321 = vadd.f32 0.0, %v1320
    %v1322 = vpop.f32.mrf.mxu0
    %1323 = vdwg.mxu0
    %v1324 = vmax.f32 %v583, 0.0
    %v1325 = vmax.f32 %v586, 0.0
    %v1326 = vmax.f32 %v632, 0.0
    %v1327 = vmax.f32 %v635, 0.0
    %v1328 = vmax.f32 %v681, 0.0
    %v1329 = vmax.f32 %v684, 0.0
    %v1330 = vmax.f32 %v730, 0.0
    %v1331 = vmax.f32 %v733, 0.0
    %v1332 = vmax.f32 %v779, 0.0
    %v1333 = vmax.f32 %v782, 0.0
    %v1334 = vmax.f32 %v828, 0.0
    %v1335 = vmax.f32 %v831, 0.0
    %v1336 = vmax.f32 %v877, 0.0
    %v1337 = vmax.f32 %v880, 0.0
    %v1338 = vmax.f32 %v926, 0.0
    %v1339 = vmax.f32 %v929, 0.0
    %v1340 = vmax.f32 %v975, 0.0
    %v1341 = vmax.f32 %v978, 0.0
    %v1342 = vmax.f32 %v1024, 0.0
    %v1343 = vmax.f32 %v1027, 0.0
    %v1344 = vmax.f32 %v1073, 0.0
    %v1345 = vmax.f32 %v1076, 0.0
    %v1346 = vmax.f32 %v1122, 0.0
    %v1347 = vmax.f32 %v1125, 0.0
    %v1348 = vmax.f32 %v1171, 0.0
    %v1349 = vmax.f32 %v1174, 0.0
    %v1350 = vmax.f32 %v1220, 0.0
    %v1351 = vmax.f32 %v1223, 0.0
    %v1352 = vmax.f32 %v1269, 0.0
    %v1353 = vmax.f32 %v1272, 0.0
    %v1354 = vmax.f32 %v1318, 0.0
    %v1355 = vmax.f32 %v1321, 0.0
    %v1356 = vmax.f32 %v367, 0.0
    %v1357 = vmax.f32 %v371, 0.0
    %v1358 = vmax.f32 %v377, 0.0
    %v1359 = vmax.f32 %v381, 0.0
    %v1360 = vmax.f32 %v387, 0.0
    %v1361 = vmax.f32 %v391, 0.0
    %v1362 = vmax.f32 %v397, 0.0
    %v1363 = vmax.f32 %v401, 0.0
    %v1364 = vmax.f32 %v407, 0.0
    %v1365 = vmax.f32 %v411, 0.0
    %v1366 = vmax.f32 %v417, 0.0
    %v1367 = vmax.f32 %v421, 0.0
    %v1368 = vmax.f32 %v427, 0.0
    %v1369 = vmax.f32 %v431, 0.0
    %v1370 = vmax.f32 %v437, 0.0
    %v1371 = vmax.f32 %v441, 0.0
    %v1372 = vmax.f32 %v447, 0.0
    %v1373 = vmax.f32 %v451, 0.0
    %v1374 = vmax.f32 %v457, 0.0
    %v1375 = vmax.f32 %v461, 0.0
    %v1376 = vmax.f32 %v467, 0.0
    %v1377 = vmax.f32 %v471, 0.0
    %v1378 = vmax.f32 %v477, 0.0
    %v1379 = vmax.f32 %v481, 0.0
    %v1380 = vmax.f32 %v487, 0.0
    %v1381 = vmax.f32 %v491, 0.0
    %v1382 = vmax.f32 %v497, 0.0
    %v1383 = vmax.f32 %v501, 0.0
    %v1384 = vmax.f32 %v507, 0.0
    %v1385 = vmax.f32 %v511, 0.0
    %v1386 = vmax.f32 %v517, 0.0
    %v1387 = vmax.f32 %v521, 0.0
    %v1388 = vadd.f32 %v1324, %v1356
    %v1389 = vadd.f32 %v1325, %v1357
    %v1390 = vadd.f32 %v1326, %v1358
    %v1391 = vadd.f32 %v1327, %v1359
    %v1392 = vadd.f32 %v1328, %v1360
    %v1393 = vadd.f32 %v1329, %v1361
    %v1394 = vadd.f32 %v1330, %v1362
    %v1395 = vadd.f32 %v1331, %v1363
    %v1396 = vadd.f32 %v1332, %v1364
    %v1397 = vadd.f32 %v1333, %v1365
    %v1398 = vadd.f32 %v1334, %v1366
    %v1399 = vadd.f32 %v1335, %v1367
    %v1400 = vadd.f32 %v1336, %v1368
    %v1401 = vadd.f32 %v1337, %v1369
    %v1402 = vadd.f32 %v1338, %v1370
    %v1403 = vadd.f32 %v1339, %v1371
    %v1404 = vadd.f32 %v1340, %v1372
    %v1405 = vadd.f32 %v1341, %v1373
    %v1406 = vadd.f32 %v1342, %v1374
    %v1407 = vadd.f32 %v1343, %v1375
    %v1408 = vadd.f32 %v1344, %v1376
    %v1409 = vadd.f32 %v1345, %v1377
    %v1410 = vadd.f32 %v1346, %v1378
    %v1411 = vadd.f32 %v1347, %v1379
    %v1412 = vadd.f32 %v1348, %v1380
    %v1413 = vadd.f32 %v1349, %v1381
    %v1414 = vadd.f32 %v1350, %v1382
    %v1415 = vadd.f32 %v1351, %v1383
    %v1416 = vadd.f32 %v1352, %v1384
    %v1417 = vadd.f32 %v1353, %v1385
    %v1418 = vadd.f32 %v1354, %v1386
    %v1419 = vadd.f32 %v1355, %v1387
    %v1420 = vpack.c.bf16 %v1389, %v1388
    %v1421 = vpack.c.bf16 %v1391, %v1390
    %v1422 = vpack.c.bf16 %v1393, %v1392
    %v1423 = vpack.c.bf16 %v1395, %v1394
    %v1424 = vpack.c.bf16 %v1397, %v1396
    %v1425 = vpack.c.bf16 %v1399, %v1398
    %v1426 = vpack.c.bf16 %v1401, %v1400
    %v1427 = vpack.c.bf16 %v1403, %v1402
    %v1428 = vpack.c.bf16 %v1405, %v1404
    %v1429 = vpack.c.bf16 %v1407, %v1406
    %v1430 = vpack.c.bf16 %v1409, %v1408
    %v1431 = vpack.c.bf16 %v1411, %v1410
    %v1432 = vpack.c.bf16 %v1413, %v1412
    %v1433 = vpack.c.bf16 %v1415, %v1414
    %v1434 = vpack.c.bf16 %v1417, %v1416
    %v1435 = vpack.c.bf16 %v1419, %v1418
    %v1436 = vld [vmem:[#allocation8] sm:$0xff]
    %v1437 = vld [vmem:[#allocation8 + $0x8] sm:$0xff]
    %v1438 = vld [vmem:[#allocation8 + $0x10] sm:$0xff]
    %v1439 = vld [vmem:[#allocation8 + $0x18] sm:$0xff]
    %v1440 = vld [vmem:[#allocation8 + $0x20] sm:$0xff]
    %v1441 = vld [vmem:[#allocation8 + $0x28] sm:$0xff]
    %v1442 = vld [vmem:[#allocation8 + $0x30] sm:$0xff]
    %v1443 = vld [vmem:[#allocation8 + $0x38] sm:$0xff]
    %v1444 = vld [vmem:[#allocation8 + $0x40] sm:$0xff]
    %v1445 = vld [vmem:[#allocation8 + $0x48] sm:$0xff]
    %v1446 = vld [vmem:[#allocation8 + $0x50] sm:$0xff]
    %v1447 = vld [vmem:[#allocation8 + $0x58] sm:$0xff]
    %v1448 = vld [vmem:[#allocation8 + $0x60] sm:$0xff]
    %v1449 = vld [vmem:[#allocation8 + $0x68] sm:$0xff]
    %v1450 = vld [vmem:[#allocation8 + $0x70] sm:$0xff]
    %v1451 = vld [vmem:[#allocation8 + $0x78] sm:$0xff]
    %v1468 = vunpack.c.l.b16 %v1436
    %v1469 = vunpack.c.h.b16 %v1436
    %v1470 = vunpack.c.l.b16 %v1437
    %v1471 = vunpack.c.h.b16 %v1437
    %v1472 = vunpack.c.l.b16 %v1438
    %v1473 = vunpack.c.h.b16 %v1438
    %v1474 = vunpack.c.l.b16 %v1439
    %v1475 = vunpack.c.h.b16 %v1439
    %v1476 = vunpack.c.l.b16 %v1440
    %v1477 = vunpack.c.h.b16 %v1440
    %v1478 = vunpack.c.l.b16 %v1441
    %v1479 = vunpack.c.h.b16 %v1441
    %v1480 = vunpack.c.l.b16 %v1442
    %v1481 = vunpack.c.h.b16 %v1442
    %v1482 = vunpack.c.l.b16 %v1443
    %v1483 = vunpack.c.h.b16 %v1443
    %v1484 = vunpack.c.l.b16 %v1444
    %v1485 = vunpack.c.h.b16 %v1444
    %v1486 = vunpack.c.l.b16 %v1445
    %v1487 = vunpack.c.h.b16 %v1445
    %v1488 = vunpack.c.l.b16 %v1446
    %v1489 = vunpack.c.h.b16 %v1446
    %v1490 = vunpack.c.l.b16 %v1447
    %v1491 = vunpack.c.h.b16 %v1447
    %v1492 = vunpack.c.l.b16 %v1448
    %v1493 = vunpack.c.h.b16 %v1448
    %v1494 = vunpack.c.l.b16 %v1449
    %v1495 = vunpack.c.h.b16 %v1449
    %v1496 = vunpack.c.l.b16 %v1450
    %v1497 = vunpack.c.h.b16 %v1450
    %v1498 = vunpack.c.l.b16 %v1451
    %v1499 = vunpack.c.h.b16 %v1451
    %v1500 = vpack.c.b16 %v1470, %v1468
    %v1501 = vpack.c.b16 %v1471, %v1469
    %v1502 = vpack.c.b16 %v1474, %v1472
    %v1503 = vpack.c.b16 %v1475, %v1473
    %v1504 = vpack.c.b16 %v1478, %v1476
    %v1505 = vpack.c.b16 %v1479, %v1477
    %v1506 = vpack.c.b16 %v1482, %v1480
    %v1507 = vpack.c.b16 %v1483, %v1481
    %v1508 = vpack.c.b16 %v1486, %v1484
    %v1509 = vpack.c.b16 %v1487, %v1485
    %v1510 = vpack.c.b16 %v1490, %v1488
    %v1511 = vpack.c.b16 %v1491, %v1489
    %v1512 = vpack.c.b16 %v1494, %v1492
    %v1513 = vpack.c.b16 %v1495, %v1493
    %v1514 = vpack.c.b16 %v1498, %v1496
    %v1515 = vpack.c.b16 %v1499, %v1497
    %1532 = vmatprep.subr.bf16.mxu0 %v1515
    %1533 = vmatpush1.bf16.msra.mxu0 %v1514
    %1534 = vmatprep.subr.bf16.mxu0 %v1513
    %1535 = vmatpush1.bf16.msra.mxu0 %v1512
    %1536 = vmatprep.subr.bf16.mxu0 %v1511
    %1537 = vmatpush1.bf16.msra.mxu0 %v1510
    %1538 = vmatprep.subr.bf16.mxu0 %v1509
    %1539 = vmatpush1.bf16.msra.mxu0 %v1508
    %1540 = vmatprep.subr.bf16.mxu0 %v1507
    %1541 = vmatpush1.bf16.msra.mxu0 %v1506
    %1542 = vmatprep.subr.bf16.mxu0 %v1505
    %1543 = vmatpush1.bf16.msra.mxu0 %v1504
    %1544 = vmatprep.subr.bf16.mxu0 %v1503
    %1545 = vmatpush1.bf16.msra.mxu0 %v1502
    %1546 = vmatprep.subr.bf16.mxu0 %v1501
    %1547 = vmatpush1.bf16.msra.mxu0 %v1500
    %1548 = vmatprep.subr.bf16.mxu0 0
    %1549 = vmatpush2.bf16.msra.mxu0 0
    %1550 = vmatprep.subr.bf16.mxu0 0
    %1551 = vmatpush2.bf16.msra.mxu0 0
    %1552 = vmatprep.subr.bf16.mxu0 0
    %1553 = vmatpush2.bf16.msra.mxu0 0
    %1554 = vmatprep.subr.bf16.mxu0 0
    %1555 = vmatpush2.bf16.msra.mxu0 0
    %1556 = vmatprep.subr.bf16.mxu0 0
    %1557 = vmatpush2.bf16.msra.mxu0 0
    %1558 = vmatprep.subr.bf16.mxu0 0
    %1559 = vmatpush2.bf16.msra.mxu0 0
    %1560 = vmatprep.subr.bf16.mxu0 0
    %1561 = vmatpush2.bf16.msra.mxu0 0
    %1562 = vmatprep.subr.bf16.mxu0 0
    %1563 = vmatpush2.bf16.msra.mxu0 0
    %1564 = vmatprep.mubr.bf16.mxu0 0
    %1565 = vmatmul.mubr.bf16.gmra.mxu0 %v1420
    %v1566 = vpop.f32.mrf.mxu0
    %v1567 = vadd.f32 0.0, %v1566
    %v1568 = vpop.f32.mrf.mxu0
    %v1569 = vadd.f32 0.0, %v1568
    %v1570 = vpop.f32.mrf.mxu0
    %v1571 = vadd.f32 0.0, %v1570
    %v1572 = vpop.f32.mrf.mxu0
    %v1573 = vadd.f32 0.0, %v1572
    %1574 = vmatprep.mubr.bf16.mxu0 0
    %1575 = vmatmul.mubr.bf16.gmra.mxu0 %v1421
    %v1576 = vpop.f32.mrf.mxu0
    %v1577 = vadd.f32 0.0, %v1576
    %v1578 = vpop.f32.mrf.mxu0
    %v1579 = vadd.f32 0.0, %v1578
    %v1580 = vpop.f32.mrf.mxu0
    %v1581 = vadd.f32 0.0, %v1580
    %v1582 = vpop.f32.mrf.mxu0
    %v1583 = vadd.f32 0.0, %v1582
    %1584 = vmatprep.mubr.bf16.mxu0 0
    %1585 = vmatmul.mubr.bf16.gmra.mxu0 %v1422
    %v1586 = vpop.f32.mrf.mxu0
    %v1587 = vadd.f32 0.0, %v1586
    %v1588 = vpop.f32.mrf.mxu0
    %v1589 = vadd.f32 0.0, %v1588
    %v1590 = vpop.f32.mrf.mxu0
    %v1591 = vadd.f32 0.0, %v1590
    %v1592 = vpop.f32.mrf.mxu0
    %v1593 = vadd.f32 0.0, %v1592
    %1594 = vmatprep.mubr.bf16.mxu0 0
    %1595 = vmatmul.mubr.bf16.gmra.mxu0 %v1423
    %v1596 = vpop.f32.mrf.mxu0
    %v1597 = vadd.f32 0.0, %v1596
    %v1598 = vpop.f32.mrf.mxu0
    %v1599 = vadd.f32 0.0, %v1598
    %v1600 = vpop.f32.mrf.mxu0
    %v1601 = vadd.f32 0.0, %v1600
    %v1602 = vpop.f32.mrf.mxu0
    %v1603 = vadd.f32 0.0, %v1602
    %1604 = vmatprep.mubr.bf16.mxu0 0
    %1605 = vmatmul.mubr.bf16.gmra.mxu0 %v1424
    %v1606 = vpop.f32.mrf.mxu0
    %v1607 = vadd.f32 0.0, %v1606
    %v1608 = vpop.f32.mrf.mxu0
    %v1609 = vadd.f32 0.0, %v1608
    %v1610 = vpop.f32.mrf.mxu0
    %v1611 = vadd.f32 0.0, %v1610
    %v1612 = vpop.f32.mrf.mxu0
    %v1613 = vadd.f32 0.0, %v1612
    %1614 = vmatprep.mubr.bf16.mxu0 0
    %1615 = vmatmul.mubr.bf16.gmra.mxu0 %v1425
    %v1616 = vpop.f32.mrf.mxu0
    %v1617 = vadd.f32 0.0, %v1616
    %v1618 = vpop.f32.mrf.mxu0
    %v1619 = vadd.f32 0.0, %v1618
    %v1620 = vpop.f32.mrf.mxu0
    %v1621 = vadd.f32 0.0, %v1620
    %v1622 = vpop.f32.mrf.mxu0
    %v1623 = vadd.f32 0.0, %v1622
    %1624 = vmatprep.mubr.bf16.mxu0 0
    %1625 = vmatmul.mubr.bf16.gmra.mxu0 %v1426
    %v1626 = vpop.f32.mrf.mxu0
    %v1627 = vadd.f32 0.0, %v1626
    %v1628 = vpop.f32.mrf.mxu0
    %v1629 = vadd.f32 0.0, %v1628
    %v1630 = vpop.f32.mrf.mxu0
    %v1631 = vadd.f32 0.0, %v1630
    %v1632 = vpop.f32.mrf.mxu0
    %v1633 = vadd.f32 0.0, %v1632
    %1634 = vmatprep.mubr.bf16.mxu0 0
    %1635 = vmatmul.mubr.bf16.gmra.mxu0 %v1427
    %v1636 = vpop.f32.mrf.mxu0
    %v1637 = vadd.f32 0.0, %v1636
    %v1638 = vpop.f32.mrf.mxu0
    %v1639 = vadd.f32 0.0, %v1638
    %v1640 = vpop.f32.mrf.mxu0
    %v1641 = vadd.f32 0.0, %v1640
    %v1642 = vpop.f32.mrf.mxu0
    %v1643 = vadd.f32 0.0, %v1642
    %1644 = vmatprep.mubr.bf16.mxu0 0
    %1645 = vmatmul.mubr.bf16.gmra.mxu0 %v1428
    %v1646 = vpop.f32.mrf.mxu0
    %v1647 = vadd.f32 0.0, %v1646
    %v1648 = vpop.f32.mrf.mxu0
    %v1649 = vadd.f32 0.0, %v1648
    %v1650 = vpop.f32.mrf.mxu0
    %v1651 = vadd.f32 0.0, %v1650
    %v1652 = vpop.f32.mrf.mxu0
    %v1653 = vadd.f32 0.0, %v1652
    %1654 = vmatprep.mubr.bf16.mxu0 0
    %1655 = vmatmul.mubr.bf16.gmra.mxu0 %v1429
    %v1656 = vpop.f32.mrf.mxu0
    %v1657 = vadd.f32 0.0, %v1656
    %v1658 = vpop.f32.mrf.mxu0
    %v1659 = vadd.f32 0.0, %v1658
    %v1660 = vpop.f32.mrf.mxu0
    %v1661 = vadd.f32 0.0, %v1660
    %v1662 = vpop.f32.mrf.mxu0
    %v1663 = vadd.f32 0.0, %v1662
    %1664 = vmatprep.mubr.bf16.mxu0 0
    %1665 = vmatmul.mubr.bf16.gmra.mxu0 %v1430
    %v1666 = vpop.f32.mrf.mxu0
    %v1667 = vadd.f32 0.0, %v1666
    %v1668 = vpop.f32.mrf.mxu0
    %v1669 = vadd.f32 0.0, %v1668
    %v1670 = vpop.f32.mrf.mxu0
    %v1671 = vadd.f32 0.0, %v1670
    %v1672 = vpop.f32.mrf.mxu0
    %v1673 = vadd.f32 0.0, %v1672
    %1674 = vmatprep.mubr.bf16.mxu0 0
    %1675 = vmatmul.mubr.bf16.gmra.mxu0 %v1431
    %v1676 = vpop.f32.mrf.mxu0
    %v1677 = vadd.f32 0.0, %v1676
    %v1678 = vpop.f32.mrf.mxu0
    %v1679 = vadd.f32 0.0, %v1678
    %v1680 = vpop.f32.mrf.mxu0
    %v1681 = vadd.f32 0.0, %v1680
    %v1682 = vpop.f32.mrf.mxu0
    %v1683 = vadd.f32 0.0, %v1682
    %1684 = vmatprep.mubr.bf16.mxu0 0
    %1685 = vmatmul.mubr.bf16.gmra.mxu0 %v1432
    %v1686 = vpop.f32.mrf.mxu0
    %v1687 = vadd.f32 0.0, %v1686
    %v1688 = vpop.f32.mrf.mxu0
    %v1689 = vadd.f32 0.0, %v1688
    %v1690 = vpop.f32.mrf.mxu0
    %v1691 = vadd.f32 0.0, %v1690
    %v1692 = vpop.f32.mrf.mxu0
    %v1693 = vadd.f32 0.0, %v1692
    %1694 = vmatprep.mubr.bf16.mxu0 0
    %1695 = vmatmul.mubr.bf16.gmra.mxu0 %v1433
    %v1696 = vpop.f32.mrf.mxu0
    %v1697 = vadd.f32 0.0, %v1696
    %v1698 = vpop.f32.mrf.mxu0
    %v1699 = vadd.f32 0.0, %v1698
    %v1700 = vpop.f32.mrf.mxu0
    %v1701 = vadd.f32 0.0, %v1700
    %v1702 = vpop.f32.mrf.mxu0
    %v1703 = vadd.f32 0.0, %v1702
    %1704 = vmatprep.mubr.bf16.mxu0 0
    %1705 = vmatmul.mubr.bf16.gmra.mxu0 %v1434
    %v1706 = vpop.f32.mrf.mxu0
    %v1707 = vadd.f32 0.0, %v1706
    %v1708 = vpop.f32.mrf.mxu0
    %v1709 = vadd.f32 0.0, %v1708
    %v1710 = vpop.f32.mrf.mxu0
    %v1711 = vadd.f32 0.0, %v1710
    %v1712 = vpop.f32.mrf.mxu0
    %v1713 = vadd.f32 0.0, %v1712
    %1714 = vmatprep.mubr.bf16.mxu0 0
    %1715 = vmatmul.mubr.bf16.gmra.mxu0 %v1435
    %v1716 = vpop.f32.mrf.mxu0
    %v1717 = vadd.f32 0.0, %v1716
    %v1718 = vpop.f32.mrf.mxu0
    %v1719 = vadd.f32 0.0, %v1718
    %v1720 = vpop.f32.mrf.mxu0
    %v1721 = vadd.f32 0.0, %v1720
    %v1722 = vpop.f32.mrf.mxu0
    %v1723 = vadd.f32 0.0, %v1722
    %1724 = vdwg.mxu0
    %v1725 = vpack.c.bf16 %v1571, %v1567
    %v1726 = vpack.c.bf16 %v1581, %v1577
    %v1727 = vpack.c.bf16 %v1591, %v1587
    %v1728 = vpack.c.bf16 %v1601, %v1597
    %v1729 = vpack.c.bf16 %v1611, %v1607
    %v1730 = vpack.c.bf16 %v1621, %v1617
    %v1731 = vpack.c.bf16 %v1631, %v1627
    %v1732 = vpack.c.bf16 %v1641, %v1637
    %v1733 = vpack.c.bf16 %v1651, %v1647
    %v1734 = vpack.c.bf16 %v1661, %v1657
    %v1735 = vpack.c.bf16 %v1671, %v1667
    %v1736 = vpack.c.bf16 %v1681, %v1677
    %v1737 = vpack.c.bf16 %v1691, %v1687
    %v1738 = vpack.c.bf16 %v1701, %v1697
    %v1739 = vpack.c.bf16 %v1711, %v1707
    %v1740 = vpack.c.bf16 %v1721, %v1717
    %1741 = vmatprep.subr.bf16.mxu0 0
    %1742 = vmatpush1.bf16.msra.mxu0 0
    %1743 = vmatprep.subr.bf16.mxu0 0
    %1744 = vmatpush1.bf16.msra.mxu0 0
    %1745 = vmatprep.subr.bf16.mxu0 0
    %1746 = vmatpush1.bf16.msra.mxu0 0
    %1747 = vmatprep.subr.bf16.mxu0 0
    %1748 = vmatpush1.bf16.msra.mxu0 0
    %1749 = vmatprep.subr.bf16.mxu0 0
    %1750 = vmatpush1.bf16.msra.mxu0 0
    %1751 = vmatprep.subr.bf16.mxu0 0
    %1752 = vmatpush1.bf16.msra.mxu0 0
    %1753 = vmatprep.subr.bf16.mxu0 0
    %1754 = vmatpush1.bf16.msra.mxu0 0
    %1755 = vmatprep.subr.bf16.mxu0 0
    %1756 = vmatpush1.bf16.msra.mxu0 %v1725
    %1757 = vmatprep.subr.bf16.mxu0 0
    %1758 = vmatpush2.bf16.msra.mxu0 0
    %1759 = vmatprep.subr.bf16.mxu0 0
    %1760 = vmatpush2.bf16.msra.mxu0 0
    %1761 = vmatprep.subr.bf16.mxu0 0
    %1762 = vmatpush2.bf16.msra.mxu0 0
    %1763 = vmatprep.subr.bf16.mxu0 0
    %1764 = vmatpush2.bf16.msra.mxu0 0
    %1765 = vmatprep.subr.bf16.mxu0 0
    %1766 = vmatpush2.bf16.msra.mxu0 0
    %1767 = vmatprep.subr.bf16.mxu0 0
    %1768 = vmatpush2.bf16.msra.mxu0 0
    %1769 = vmatprep.subr.bf16.mxu0 0
    %1770 = vmatpush2.bf16.msra.mxu0 0
    %1771 = vmatprep.subr.bf16.mxu0 0
    %1772 = vmatpush2.bf16.msra.mxu0 0
    %1773 = vmatprep.mubr.bf16.mxu0 0
    %1774 = vmatmul.mubr.bf16.gmra.mxu0 %v546
    %v1775 = vpop.f32.mrf.mxu0
    %v1776 = vadd.f32 0.0, %v1775
    %v1777 = vpop.f32.mrf.mxu0
    %v1778 = vpop.f32.mrf.mxu0
    %v1779 = vadd.f32 0.0, %v1778
    %v1780 = vpop.f32.mrf.mxu0
    %1781 = vdwg.mxu0
    %1782 = vmatprep.subr.bf16.mxu0 0
    %1783 = vmatpush1.bf16.msra.mxu0 0
    %1784 = vmatprep.subr.bf16.mxu0 0
    %1785 = vmatpush1.bf16.msra.mxu0 0
    %1786 = vmatprep.subr.bf16.mxu0 0
    %1787 = vmatpush1.bf16.msra.mxu0 0
    %1788 = vmatprep.subr.bf16.mxu0 0
    %1789 = vmatpush1.bf16.msra.mxu0 0
    %1790 = vmatprep.subr.bf16.mxu0 0
    %1791 = vmatpush1.bf16.msra.mxu0 0
    %1792 = vmatprep.subr.bf16.mxu0 0
    %1793 = vmatpush1.bf16.msra.mxu0 0
    %1794 = vmatprep.subr.bf16.mxu0 0
    %1795 = vmatpush1.bf16.msra.mxu0 0
    %1796 = vmatprep.subr.bf16.mxu0 0
    %1797 = vmatpush1.bf16.msra.mxu0 %v1726
    %1798 = vmatprep.subr.bf16.mxu0 0
    %1799 = vmatpush2.bf16.msra.mxu0 0
    %1800 = vmatprep.subr.bf16.mxu0 0
    %1801 = vmatpush2.bf16.msra.mxu0 0
    %1802 = vmatprep.subr.bf16.mxu0 0
    %1803 = vmatpush2.bf16.msra.mxu0 0
    %1804 = vmatprep.subr.bf16.mxu0 0
    %1805 = vmatpush2.bf16.msra.mxu0 0
    %1806 = vmatprep.subr.bf16.mxu0 0
    %1807 = vmatpush2.bf16.msra.mxu0 0
    %1808 = vmatprep.subr.bf16.mxu0 0
    %1809 = vmatpush2.bf16.msra.mxu0 0
    %1810 = vmatprep.subr.bf16.mxu0 0
    %1811 = vmatpush2.bf16.msra.mxu0 0
    %1812 = vmatprep.subr.bf16.mxu0 0
    %1813 = vmatpush2.bf16.msra.mxu0 0
    %1814 = vmatprep.mubr.bf16.mxu0 0
    %1815 = vmatmul.mubr.bf16.gmra.mxu0 %v595
    %v1816 = vpop.f32.mrf.mxu0
    %v1817 = vadd.f32 0.0, %v1816
    %v1818 = vpop.f32.mrf.mxu0
    %v1819 = vpop.f32.mrf.mxu0
    %v1820 = vadd.f32 0.0, %v1819
    %v1821 = vpop.f32.mrf.mxu0
    %1822 = vdwg.mxu0
    %1823 = vmatprep.subr.bf16.mxu0 0
    %1824 = vmatpush1.bf16.msra.mxu0 0
    %1825 = vmatprep.subr.bf16.mxu0 0
    %1826 = vmatpush1.bf16.msra.mxu0 0
    %1827 = vmatprep.subr.bf16.mxu0 0
    %1828 = vmatpush1.bf16.msra.mxu0 0
    %1829 = vmatprep.subr.bf16.mxu0 0
    %1830 = vmatpush1.bf16.msra.mxu0 0
    %1831 = vmatprep.subr.bf16.mxu0 0
    %1832 = vmatpush1.bf16.msra.mxu0 0
    %1833 = vmatprep.subr.bf16.mxu0 0
    %1834 = vmatpush1.bf16.msra.mxu0 0
    %1835 = vmatprep.subr.bf16.mxu0 0
    %1836 = vmatpush1.bf16.msra.mxu0 0
    %1837 = vmatprep.subr.bf16.mxu0 0
    %1838 = vmatpush1.bf16.msra.mxu0 %v1727
    %1839 = vmatprep.subr.bf16.mxu0 0
    %1840 = vmatpush2.bf16.msra.mxu0 0
    %1841 = vmatprep.subr.bf16.mxu0 0
    %1842 = vmatpush2.bf16.msra.mxu0 0
    %1843 = vmatprep.subr.bf16.mxu0 0
    %1844 = vmatpush2.bf16.msra.mxu0 0
    %1845 = vmatprep.subr.bf16.mxu0 0
    %1846 = vmatpush2.bf16.msra.mxu0 0
    %1847 = vmatprep.subr.bf16.mxu0 0
    %1848 = vmatpush2.bf16.msra.mxu0 0
    %1849 = vmatprep.subr.bf16.mxu0 0
    %1850 = vmatpush2.bf16.msra.mxu0 0
    %1851 = vmatprep.subr.bf16.mxu0 0
    %1852 = vmatpush2.bf16.msra.mxu0 0
    %1853 = vmatprep.subr.bf16.mxu0 0
    %1854 = vmatpush2.bf16.msra.mxu0 0
    %1855 = vmatprep.mubr.bf16.mxu0 0
    %1856 = vmatmul.mubr.bf16.gmra.mxu0 %v644
    %v1857 = vpop.f32.mrf.mxu0
    %v1858 = vadd.f32 0.0, %v1857
    %v1859 = vpop.f32.mrf.mxu0
    %v1860 = vpop.f32.mrf.mxu0
    %v1861 = vadd.f32 0.0, %v1860
    %v1862 = vpop.f32.mrf.mxu0
    %1863 = vdwg.mxu0
    %1864 = vmatprep.subr.bf16.mxu0 0
    %1865 = vmatpush1.bf16.msra.mxu0 0
    %1866 = vmatprep.subr.bf16.mxu0 0
    %1867 = vmatpush1.bf16.msra.mxu0 0
    %1868 = vmatprep.subr.bf16.mxu0 0
    %1869 = vmatpush1.bf16.msra.mxu0 0
    %1870 = vmatprep.subr.bf16.mxu0 0
    %1871 = vmatpush1.bf16.msra.mxu0 0
    %1872 = vmatprep.subr.bf16.mxu0 0
    %1873 = vmatpush1.bf16.msra.mxu0 0
    %1874 = vmatprep.subr.bf16.mxu0 0
    %1875 = vmatpush1.bf16.msra.mxu0 0
    %1876 = vmatprep.subr.bf16.mxu0 0
    %1877 = vmatpush1.bf16.msra.mxu0 0
    %1878 = vmatprep.subr.bf16.mxu0 0
    %1879 = vmatpush1.bf16.msra.mxu0 %v1728
    %1880 = vmatprep.subr.bf16.mxu0 0
    %1881 = vmatpush2.bf16.msra.mxu0 0
    %1882 = vmatprep.subr.bf16.mxu0 0
    %1883 = vmatpush2.bf16.msra.mxu0 0
    %1884 = vmatprep.subr.bf16.mxu0 0
    %1885 = vmatpush2.bf16.msra.mxu0 0
    %1886 = vmatprep.subr.bf16.mxu0 0
    %1887 = vmatpush2.bf16.msra.mxu0 0
    %1888 = vmatprep.subr.bf16.mxu0 0
    %1889 = vmatpush2.bf16.msra.mxu0 0
    %1890 = vmatprep.subr.bf16.mxu0 0
    %1891 = vmatpush2.bf16.msra.mxu0 0
    %1892 = vmatprep.subr.bf16.mxu0 0
    %1893 = vmatpush2.bf16.msra.mxu0 0
    %1894 = vmatprep.subr.bf16.mxu0 0
    %1895 = vmatpush2.bf16.msra.mxu0 0
    %1896 = vmatprep.mubr.bf16.mxu0 0
    %1897 = vmatmul.mubr.bf16.gmra.mxu0 %v693
    %v1898 = vpop.f32.mrf.mxu0
    %v1899 = vadd.f32 0.0, %v1898
    %v1900 = vpop.f32.mrf.mxu0
    %v1901 = vpop.f32.mrf.mxu0
    %v1902 = vadd.f32 0.0, %v1901
    %v1903 = vpop.f32.mrf.mxu0
    %1904 = vdwg.mxu0
    %1905 = vmatprep.subr.bf16.mxu0 0
    %1906 = vmatpush1.bf16.msra.mxu0 0
    %1907 = vmatprep.subr.bf16.mxu0 0
    %1908 = vmatpush1.bf16.msra.mxu0 0
    %1909 = vmatprep.subr.bf16.mxu0 0
    %1910 = vmatpush1.bf16.msra.mxu0 0
    %1911 = vmatprep.subr.bf16.mxu0 0
    %1912 = vmatpush1.bf16.msra.mxu0 0
    %1913 = vmatprep.subr.bf16.mxu0 0
    %1914 = vmatpush1.bf16.msra.mxu0 0
    %1915 = vmatprep.subr.bf16.mxu0 0
    %1916 = vmatpush1.bf16.msra.mxu0 0
    %1917 = vmatprep.subr.bf16.mxu0 0
    %1918 = vmatpush1.bf16.msra.mxu0 0
    %1919 = vmatprep.subr.bf16.mxu0 0
    %1920 = vmatpush1.bf16.msra.mxu0 %v1729
    %1921 = vmatprep.subr.bf16.mxu0 0
    %1922 = vmatpush2.bf16.msra.mxu0 0
    %1923 = vmatprep.subr.bf16.mxu0 0
    %1924 = vmatpush2.bf16.msra.mxu0 0
    %1925 = vmatprep.subr.bf16.mxu0 0
    %1926 = vmatpush2.bf16.msra.mxu0 0
    %1927 = vmatprep.subr.bf16.mxu0 0
    %1928 = vmatpush2.bf16.msra.mxu0 0
    %1929 = vmatprep.subr.bf16.mxu0 0
    %1930 = vmatpush2.bf16.msra.mxu0 0
    %1931 = vmatprep.subr.bf16.mxu0 0
    %1932 = vmatpush2.bf16.msra.mxu0 0
    %1933 = vmatprep.subr.bf16.mxu0 0
    %1934 = vmatpush2.bf16.msra.mxu0 0
    %1935 = vmatprep.subr.bf16.mxu0 0
    %1936 = vmatpush2.bf16.msra.mxu0 0
    %1937 = vmatprep.mubr.bf16.mxu0 0
    %1938 = vmatmul.mubr.bf16.gmra.mxu0 %v742
    %v1939 = vpop.f32.mrf.mxu0
    %v1940 = vadd.f32 0.0, %v1939
    %v1941 = vpop.f32.mrf.mxu0
    %v1942 = vpop.f32.mrf.mxu0
    %v1943 = vadd.f32 0.0, %v1942
    %v1944 = vpop.f32.mrf.mxu0
    %1945 = vdwg.mxu0
    %1946 = vmatprep.subr.bf16.mxu0 0
    %1947 = vmatpush1.bf16.msra.mxu0 0
    %1948 = vmatprep.subr.bf16.mxu0 0
    %1949 = vmatpush1.bf16.msra.mxu0 0
    %1950 = vmatprep.subr.bf16.mxu0 0
    %1951 = vmatpush1.bf16.msra.mxu0 0
    %1952 = vmatprep.subr.bf16.mxu0 0
    %1953 = vmatpush1.bf16.msra.mxu0 0
    %1954 = vmatprep.subr.bf16.mxu0 0
    %1955 = vmatpush1.bf16.msra.mxu0 0
    %1956 = vmatprep.subr.bf16.mxu0 0
    %1957 = vmatpush1.bf16.msra.mxu0 0
    %1958 = vmatprep.subr.bf16.mxu0 0
    %1959 = vmatpush1.bf16.msra.mxu0 0
    %1960 = vmatprep.subr.bf16.mxu0 0
    %1961 = vmatpush1.bf16.msra.mxu0 %v1730
    %1962 = vmatprep.subr.bf16.mxu0 0
    %1963 = vmatpush2.bf16.msra.mxu0 0
    %1964 = vmatprep.subr.bf16.mxu0 0
    %1965 = vmatpush2.bf16.msra.mxu0 0
    %1966 = vmatprep.subr.bf16.mxu0 0
    %1967 = vmatpush2.bf16.msra.mxu0 0
    %1968 = vmatprep.subr.bf16.mxu0 0
    %1969 = vmatpush2.bf16.msra.mxu0 0
    %1970 = vmatprep.subr.bf16.mxu0 0
    %1971 = vmatpush2.bf16.msra.mxu0 0
    %1972 = vmatprep.subr.bf16.mxu0 0
    %1973 = vmatpush2.bf16.msra.mxu0 0
    %1974 = vmatprep.subr.bf16.mxu0 0
    %1975 = vmatpush2.bf16.msra.mxu0 0
    %1976 = vmatprep.subr.bf16.mxu0 0
    %1977 = vmatpush2.bf16.msra.mxu0 0
    %1978 = vmatprep.mubr.bf16.mxu0 0
    %1979 = vmatmul.mubr.bf16.gmra.mxu0 %v791
    %v1980 = vpop.f32.mrf.mxu0
    %v1981 = vadd.f32 0.0, %v1980
    %v1982 = vpop.f32.mrf.mxu0
    %v1983 = vpop.f32.mrf.mxu0
    %v1984 = vadd.f32 0.0, %v1983
    %v1985 = vpop.f32.mrf.mxu0
    %1986 = vdwg.mxu0
    %1987 = vmatprep.subr.bf16.mxu0 0
    %1988 = vmatpush1.bf16.msra.mxu0 0
    %1989 = vmatprep.subr.bf16.mxu0 0
    %1990 = vmatpush1.bf16.msra.mxu0 0
    %1991 = vmatprep.subr.bf16.mxu0 0
    %1992 = vmatpush1.bf16.msra.mxu0 0
    %1993 = vmatprep.subr.bf16.mxu0 0
    %1994 = vmatpush1.bf16.msra.mxu0 0
    %1995 = vmatprep.subr.bf16.mxu0 0
    %1996 = vmatpush1.bf16.msra.mxu0 0
    %1997 = vmatprep.subr.bf16.mxu0 0
    %1998 = vmatpush1.bf16.msra.mxu0 0
    %1999 = vmatprep.subr.bf16.mxu0 0
    %2000 = vmatpush1.bf16.msra.mxu0 0
    %2001 = vmatprep.subr.bf16.mxu0 0
    %2002 = vmatpush1.bf16.msra.mxu0 %v1731
    %2003 = vmatprep.subr.bf16.mxu0 0
    %2004 = vmatpush2.bf16.msra.mxu0 0
    %2005 = vmatprep.subr.bf16.mxu0 0
    %2006 = vmatpush2.bf16.msra.mxu0 0
    %2007 = vmatprep.subr.bf16.mxu0 0
    %2008 = vmatpush2.bf16.msra.mxu0 0
    %2009 = vmatprep.subr.bf16.mxu0 0
    %2010 = vmatpush2.bf16.msra.mxu0 0
    %2011 = vmatprep.subr.bf16.mxu0 0
    %2012 = vmatpush2.bf16.msra.mxu0 0
    %2013 = vmatprep.subr.bf16.mxu0 0
    %2014 = vmatpush2.bf16.msra.mxu0 0
    %2015 = vmatprep.subr.bf16.mxu0 0
    %2016 = vmatpush2.bf16.msra.mxu0 0
    %2017 = vmatprep.subr.bf16.mxu0 0
    %2018 = vmatpush2.bf16.msra.mxu0 0
    %2019 = vmatprep.mubr.bf16.mxu0 0
    %2020 = vmatmul.mubr.bf16.gmra.mxu0 %v840
    %v2021 = vpop.f32.mrf.mxu0
    %v2022 = vadd.f32 0.0, %v2021
    %v2023 = vpop.f32.mrf.mxu0
    %v2024 = vpop.f32.mrf.mxu0
    %v2025 = vadd.f32 0.0, %v2024
    %v2026 = vpop.f32.mrf.mxu0
    %2027 = vdwg.mxu0
    %2028 = vmatprep.subr.bf16.mxu0 0
    %2029 = vmatpush1.bf16.msra.mxu0 0
    %2030 = vmatprep.subr.bf16.mxu0 0
    %2031 = vmatpush1.bf16.msra.mxu0 0
    %2032 = vmatprep.subr.bf16.mxu0 0
    %2033 = vmatpush1.bf16.msra.mxu0 0
    %2034 = vmatprep.subr.bf16.mxu0 0
    %2035 = vmatpush1.bf16.msra.mxu0 0
    %2036 = vmatprep.subr.bf16.mxu0 0
    %2037 = vmatpush1.bf16.msra.mxu0 0
    %2038 = vmatprep.subr.bf16.mxu0 0
    %2039 = vmatpush1.bf16.msra.mxu0 0
    %2040 = vmatprep.subr.bf16.mxu0 0
    %2041 = vmatpush1.bf16.msra.mxu0 0
    %2042 = vmatprep.subr.bf16.mxu0 0
    %2043 = vmatpush1.bf16.msra.mxu0 %v1732
    %2044 = vmatprep.subr.bf16.mxu0 0
    %2045 = vmatpush2.bf16.msra.mxu0 0
    %2046 = vmatprep.subr.bf16.mxu0 0
    %2047 = vmatpush2.bf16.msra.mxu0 0
    %2048 = vmatprep.subr.bf16.mxu0 0
    %2049 = vmatpush2.bf16.msra.mxu0 0
    %2050 = vmatprep.subr.bf16.mxu0 0
    %2051 = vmatpush2.bf16.msra.mxu0 0
    %2052 = vmatprep.subr.bf16.mxu0 0
    %2053 = vmatpush2.bf16.msra.mxu0 0
    %2054 = vmatprep.subr.bf16.mxu0 0
    %2055 = vmatpush2.bf16.msra.mxu0 0
    %2056 = vmatprep.subr.bf16.mxu0 0
    %2057 = vmatpush2.bf16.msra.mxu0 0
    %2058 = vmatprep.subr.bf16.mxu0 0
    %2059 = vmatpush2.bf16.msra.mxu0 0
    %2060 = vmatprep.mubr.bf16.mxu0 0
    %2061 = vmatmul.mubr.bf16.gmra.mxu0 %v889
    %v2062 = vpop.f32.mrf.mxu0
    %v2063 = vadd.f32 0.0, %v2062
    %v2064 = vpop.f32.mrf.mxu0
    %v2065 = vpop.f32.mrf.mxu0
    %v2066 = vadd.f32 0.0, %v2065
    %v2067 = vpop.f32.mrf.mxu0
    %2068 = vdwg.mxu0
    %2069 = vmatprep.subr.bf16.mxu0 0
    %2070 = vmatpush1.bf16.msra.mxu0 0
    %2071 = vmatprep.subr.bf16.mxu0 0
    %2072 = vmatpush1.bf16.msra.mxu0 0
    %2073 = vmatprep.subr.bf16.mxu0 0
    %2074 = vmatpush1.bf16.msra.mxu0 0
    %2075 = vmatprep.subr.bf16.mxu0 0
    %2076 = vmatpush1.bf16.msra.mxu0 0
    %2077 = vmatprep.subr.bf16.mxu0 0
    %2078 = vmatpush1.bf16.msra.mxu0 0
    %2079 = vmatprep.subr.bf16.mxu0 0
    %2080 = vmatpush1.bf16.msra.mxu0 0
    %2081 = vmatprep.subr.bf16.mxu0 0
    %2082 = vmatpush1.bf16.msra.mxu0 0
    %2083 = vmatprep.subr.bf16.mxu0 0
    %2084 = vmatpush1.bf16.msra.mxu0 %v1733
    %2085 = vmatprep.subr.bf16.mxu0 0
    %2086 = vmatpush2.bf16.msra.mxu0 0
    %2087 = vmatprep.subr.bf16.mxu0 0
    %2088 = vmatpush2.bf16.msra.mxu0 0
    %2089 = vmatprep.subr.bf16.mxu0 0
    %2090 = vmatpush2.bf16.msra.mxu0 0
    %2091 = vmatprep.subr.bf16.mxu0 0
    %2092 = vmatpush2.bf16.msra.mxu0 0
    %2093 = vmatprep.subr.bf16.mxu0 0
    %2094 = vmatpush2.bf16.msra.mxu0 0
    %2095 = vmatprep.subr.bf16.mxu0 0
    %2096 = vmatpush2.bf16.msra.mxu0 0
    %2097 = vmatprep.subr.bf16.mxu0 0
    %2098 = vmatpush2.bf16.msra.mxu0 0
    %2099 = vmatprep.subr.bf16.mxu0 0
    %2100 = vmatpush2.bf16.msra.mxu0 0
    %2101 = vmatprep.mubr.bf16.mxu0 0
    %2102 = vmatmul.mubr.bf16.gmra.mxu0 %v938
    %v2103 = vpop.f32.mrf.mxu0
    %v2104 = vadd.f32 0.0, %v2103
    %v2105 = vpop.f32.mrf.mxu0
    %v2106 = vpop.f32.mrf.mxu0
    %v2107 = vadd.f32 0.0, %v2106
    %v2108 = vpop.f32.mrf.mxu0
    %2109 = vdwg.mxu0
    %2110 = vmatprep.subr.bf16.mxu0 0
    %2111 = vmatpush1.bf16.msra.mxu0 0
    %2112 = vmatprep.subr.bf16.mxu0 0
    %2113 = vmatpush1.bf16.msra.mxu0 0
    %2114 = vmatprep.subr.bf16.mxu0 0
    %2115 = vmatpush1.bf16.msra.mxu0 0
    %2116 = vmatprep.subr.bf16.mxu0 0
    %2117 = vmatpush1.bf16.msra.mxu0 0
    %2118 = vmatprep.subr.bf16.mxu0 0
    %2119 = vmatpush1.bf16.msra.mxu0 0
    %2120 = vmatprep.subr.bf16.mxu0 0
    %2121 = vmatpush1.bf16.msra.mxu0 0
    %2122 = vmatprep.subr.bf16.mxu0 0
    %2123 = vmatpush1.bf16.msra.mxu0 0
    %2124 = vmatprep.subr.bf16.mxu0 0
    %2125 = vmatpush1.bf16.msra.mxu0 %v1734
    %2126 = vmatprep.subr.bf16.mxu0 0
    %2127 = vmatpush2.bf16.msra.mxu0 0
    %2128 = vmatprep.subr.bf16.mxu0 0
    %2129 = vmatpush2.bf16.msra.mxu0 0
    %2130 = vmatprep.subr.bf16.mxu0 0
    %2131 = vmatpush2.bf16.msra.mxu0 0
    %2132 = vmatprep.subr.bf16.mxu0 0
    %2133 = vmatpush2.bf16.msra.mxu0 0
    %2134 = vmatprep.subr.bf16.mxu0 0
    %2135 = vmatpush2.bf16.msra.mxu0 0
    %2136 = vmatprep.subr.bf16.mxu0 0
    %2137 = vmatpush2.bf16.msra.mxu0 0
    %2138 = vmatprep.subr.bf16.mxu0 0
    %2139 = vmatpush2.bf16.msra.mxu0 0
    %2140 = vmatprep.subr.bf16.mxu0 0
    %2141 = vmatpush2.bf16.msra.mxu0 0
    %2142 = vmatprep.mubr.bf16.mxu0 0
    %2143 = vmatmul.mubr.bf16.gmra.mxu0 %v987
    %v2144 = vpop.f32.mrf.mxu0
    %v2145 = vadd.f32 0.0, %v2144
    %v2146 = vpop.f32.mrf.mxu0
    %v2147 = vpop.f32.mrf.mxu0
    %v2148 = vadd.f32 0.0, %v2147
    %v2149 = vpop.f32.mrf.mxu0
    %2150 = vdwg.mxu0
    %2151 = vmatprep.subr.bf16.mxu0 0
    %2152 = vmatpush1.bf16.msra.mxu0 0
    %2153 = vmatprep.subr.bf16.mxu0 0
    %2154 = vmatpush1.bf16.msra.mxu0 0
    %2155 = vmatprep.subr.bf16.mxu0 0
    %2156 = vmatpush1.bf16.msra.mxu0 0
    %2157 = vmatprep.subr.bf16.mxu0 0
    %2158 = vmatpush1.bf16.msra.mxu0 0
    %2159 = vmatprep.subr.bf16.mxu0 0
    %2160 = vmatpush1.bf16.msra.mxu0 0
    %2161 = vmatprep.subr.bf16.mxu0 0
    %2162 = vmatpush1.bf16.msra.mxu0 0
    %2163 = vmatprep.subr.bf16.mxu0 0
    %2164 = vmatpush1.bf16.msra.mxu0 0
    %2165 = vmatprep.subr.bf16.mxu0 0
    %2166 = vmatpush1.bf16.msra.mxu0 %v1735
    %2167 = vmatprep.subr.bf16.mxu0 0
    %2168 = vmatpush2.bf16.msra.mxu0 0
    %2169 = vmatprep.subr.bf16.mxu0 0
    %2170 = vmatpush2.bf16.msra.mxu0 0
    %2171 = vmatprep.subr.bf16.mxu0 0
    %2172 = vmatpush2.bf16.msra.mxu0 0
    %2173 = vmatprep.subr.bf16.mxu0 0
    %2174 = vmatpush2.bf16.msra.mxu0 0
    %2175 = vmatprep.subr.bf16.mxu0 0
    %2176 = vmatpush2.bf16.msra.mxu0 0
    %2177 = vmatprep.subr.bf16.mxu0 0
    %2178 = vmatpush2.bf16.msra.mxu0 0
    %2179 = vmatprep.subr.bf16.mxu0 0
    %2180 = vmatpush2.bf16.msra.mxu0 0
    %2181 = vmatprep.subr.bf16.mxu0 0
    %2182 = vmatpush2.bf16.msra.mxu0 0
    %2183 = vmatprep.mubr.bf16.mxu0 0
    %2184 = vmatmul.mubr.bf16.gmra.mxu0 %v1036
    %v2185 = vpop.f32.mrf.mxu0
    %v2186 = vadd.f32 0.0, %v2185
    %v2187 = vpop.f32.mrf.mxu0
    %v2188 = vpop.f32.mrf.mxu0
    %v2189 = vadd.f32 0.0, %v2188
    %v2190 = vpop.f32.mrf.mxu0
    %2191 = vdwg.mxu0
    %2192 = vmatprep.subr.bf16.mxu0 0
    %2193 = vmatpush1.bf16.msra.mxu0 0
    %2194 = vmatprep.subr.bf16.mxu0 0
    %2195 = vmatpush1.bf16.msra.mxu0 0
    %2196 = vmatprep.subr.bf16.mxu0 0
    %2197 = vmatpush1.bf16.msra.mxu0 0
    %2198 = vmatprep.subr.bf16.mxu0 0
    %2199 = vmatpush1.bf16.msra.mxu0 0
    %2200 = vmatprep.subr.bf16.mxu0 0
    %2201 = vmatpush1.bf16.msra.mxu0 0
    %2202 = vmatprep.subr.bf16.mxu0 0
    %2203 = vmatpush1.bf16.msra.mxu0 0
    %2204 = vmatprep.subr.bf16.mxu0 0
    %2205 = vmatpush1.bf16.msra.mxu0 0
    %2206 = vmatprep.subr.bf16.mxu0 0
    %2207 = vmatpush1.bf16.msra.mxu0 %v1736
    %2208 = vmatprep.subr.bf16.mxu0 0
    %2209 = vmatpush2.bf16.msra.mxu0 0
    %2210 = vmatprep.subr.bf16.mxu0 0
    %2211 = vmatpush2.bf16.msra.mxu0 0
    %2212 = vmatprep.subr.bf16.mxu0 0
    %2213 = vmatpush2.bf16.msra.mxu0 0
    %2214 = vmatprep.subr.bf16.mxu0 0
    %2215 = vmatpush2.bf16.msra.mxu0 0
    %2216 = vmatprep.subr.bf16.mxu0 0
    %2217 = vmatpush2.bf16.msra.mxu0 0
    %2218 = vmatprep.subr.bf16.mxu0 0
    %2219 = vmatpush2.bf16.msra.mxu0 0
    %2220 = vmatprep.subr.bf16.mxu0 0
    %2221 = vmatpush2.bf16.msra.mxu0 0
    %2222 = vmatprep.subr.bf16.mxu0 0
    %2223 = vmatpush2.bf16.msra.mxu0 0
    %2224 = vmatprep.mubr.bf16.mxu0 0
    %2225 = vmatmul.mubr.bf16.gmra.mxu0 %v1085
    %v2226 = vpop.f32.mrf.mxu0
    %v2227 = vadd.f32 0.0, %v2226
    %v2228 = vpop.f32.mrf.mxu0
    %v2229 = vpop.f32.mrf.mxu0
    %v2230 = vadd.f32 0.0, %v2229
    %v2231 = vpop.f32.mrf.mxu0
    %2232 = vdwg.mxu0
    %2233 = vmatprep.subr.bf16.mxu0 0
    %2234 = vmatpush1.bf16.msra.mxu0 0
    %2235 = vmatprep.subr.bf16.mxu0 0
    %2236 = vmatpush1.bf16.msra.mxu0 0
    %2237 = vmatprep.subr.bf16.mxu0 0
    %2238 = vmatpush1.bf16.msra.mxu0 0
    %2239 = vmatprep.subr.bf16.mxu0 0
    %2240 = vmatpush1.bf16.msra.mxu0 0
    %2241 = vmatprep.subr.bf16.mxu0 0
    %2242 = vmatpush1.bf16.msra.mxu0 0
    %2243 = vmatprep.subr.bf16.mxu0 0
    %2244 = vmatpush1.bf16.msra.mxu0 0
    %2245 = vmatprep.subr.bf16.mxu0 0
    %2246 = vmatpush1.bf16.msra.mxu0 0
    %2247 = vmatprep.subr.bf16.mxu0 0
    %2248 = vmatpush1.bf16.msra.mxu0 %v1737
    %2249 = vmatprep.subr.bf16.mxu0 0
    %2250 = vmatpush2.bf16.msra.mxu0 0
    %2251 = vmatprep.subr.bf16.mxu0 0
    %2252 = vmatpush2.bf16.msra.mxu0 0
    %2253 = vmatprep.subr.bf16.mxu0 0
    %2254 = vmatpush2.bf16.msra.mxu0 0
    %2255 = vmatprep.subr.bf16.mxu0 0
    %2256 = vmatpush2.bf16.msra.mxu0 0
    %2257 = vmatprep.subr.bf16.mxu0 0
    %2258 = vmatpush2.bf16.msra.mxu0 0
    %2259 = vmatprep.subr.bf16.mxu0 0
    %2260 = vmatpush2.bf16.msra.mxu0 0
    %2261 = vmatprep.subr.bf16.mxu0 0
    %2262 = vmatpush2.bf16.msra.mxu0 0
    %2263 = vmatprep.subr.bf16.mxu0 0
    %2264 = vmatpush2.bf16.msra.mxu0 0
    %2265 = vmatprep.mubr.bf16.mxu0 0
    %2266 = vmatmul.mubr.bf16.gmra.mxu0 %v1134
    %v2267 = vpop.f32.mrf.mxu0
    %v2268 = vadd.f32 0.0, %v2267
    %v2269 = vpop.f32.mrf.mxu0
    %v2270 = vpop.f32.mrf.mxu0
    %v2271 = vadd.f32 0.0, %v2270
    %v2272 = vpop.f32.mrf.mxu0
    %2273 = vdwg.mxu0
    %2274 = vmatprep.subr.bf16.mxu0 0
    %2275 = vmatpush1.bf16.msra.mxu0 0
    %2276 = vmatprep.subr.bf16.mxu0 0
    %2277 = vmatpush1.bf16.msra.mxu0 0
    %2278 = vmatprep.subr.bf16.mxu0 0
    %2279 = vmatpush1.bf16.msra.mxu0 0
    %2280 = vmatprep.subr.bf16.mxu0 0
    %2281 = vmatpush1.bf16.msra.mxu0 0
    %2282 = vmatprep.subr.bf16.mxu0 0
    %2283 = vmatpush1.bf16.msra.mxu0 0
    %2284 = vmatprep.subr.bf16.mxu0 0
    %2285 = vmatpush1.bf16.msra.mxu0 0
    %2286 = vmatprep.subr.bf16.mxu0 0
    %2287 = vmatpush1.bf16.msra.mxu0 0
    %2288 = vmatprep.subr.bf16.mxu0 0
    %2289 = vmatpush1.bf16.msra.mxu0 %v1738
    %2290 = vmatprep.subr.bf16.mxu0 0
    %2291 = vmatpush2.bf16.msra.mxu0 0
    %2292 = vmatprep.subr.bf16.mxu0 0
    %2293 = vmatpush2.bf16.msra.mxu0 0
    %2294 = vmatprep.subr.bf16.mxu0 0
    %2295 = vmatpush2.bf16.msra.mxu0 0
    %2296 = vmatprep.subr.bf16.mxu0 0
    %2297 = vmatpush2.bf16.msra.mxu0 0
    %2298 = vmatprep.subr.bf16.mxu0 0
    %2299 = vmatpush2.bf16.msra.mxu0 0
    %2300 = vmatprep.subr.bf16.mxu0 0
    %2301 = vmatpush2.bf16.msra.mxu0 0
    %2302 = vmatprep.subr.bf16.mxu0 0
    %2303 = vmatpush2.bf16.msra.mxu0 0
    %2304 = vmatprep.subr.bf16.mxu0 0
    %2305 = vmatpush2.bf16.msra.mxu0 0
    %2306 = vmatprep.mubr.bf16.mxu0 0
    %2307 = vmatmul.mubr.bf16.gmra.mxu0 %v1183
    %v2308 = vpop.f32.mrf.mxu0
    %v2309 = vadd.f32 0.0, %v2308
    %v2310 = vpop.f32.mrf.mxu0
    %v2311 = vpop.f32.mrf.mxu0
    %v2312 = vadd.f32 0.0, %v2311
    %v2313 = vpop.f32.mrf.mxu0
    %2314 = vdwg.mxu0
    %2315 = vmatprep.subr.bf16.mxu0 0
    %2316 = vmatpush1.bf16.msra.mxu0 0
    %2317 = vmatprep.subr.bf16.mxu0 0
    %2318 = vmatpush1.bf16.msra.mxu0 0
    %2319 = vmatprep.subr.bf16.mxu0 0
    %2320 = vmatpush1.bf16.msra.mxu0 0
    %2321 = vmatprep.subr.bf16.mxu0 0
    %2322 = vmatpush1.bf16.msra.mxu0 0
    %2323 = vmatprep.subr.bf16.mxu0 0
    %2324 = vmatpush1.bf16.msra.mxu0 0
    %2325 = vmatprep.subr.bf16.mxu0 0
    %2326 = vmatpush1.bf16.msra.mxu0 0
    %2327 = vmatprep.subr.bf16.mxu0 0
    %2328 = vmatpush1.bf16.msra.mxu0 0
    %2329 = vmatprep.subr.bf16.mxu0 0
    %2330 = vmatpush1.bf16.msra.mxu0 %v1739
    %2331 = vmatprep.subr.bf16.mxu0 0
    %2332 = vmatpush2.bf16.msra.mxu0 0
    %2333 = vmatprep.subr.bf16.mxu0 0
    %2334 = vmatpush2.bf16.msra.mxu0 0
    %2335 = vmatprep.subr.bf16.mxu0 0
    %2336 = vmatpush2.bf16.msra.mxu0 0
    %2337 = vmatprep.subr.bf16.mxu0 0
    %2338 = vmatpush2.bf16.msra.mxu0 0
    %2339 = vmatprep.subr.bf16.mxu0 0
    %2340 = vmatpush2.bf16.msra.mxu0 0
    %2341 = vmatprep.subr.bf16.mxu0 0
    %2342 = vmatpush2.bf16.msra.mxu0 0
    %2343 = vmatprep.subr.bf16.mxu0 0
    %2344 = vmatpush2.bf16.msra.mxu0 0
    %2345 = vmatprep.subr.bf16.mxu0 0
    %2346 = vmatpush2.bf16.msra.mxu0 0
    %2347 = vmatprep.mubr.bf16.mxu0 0
    %2348 = vmatmul.mubr.bf16.gmra.mxu0 %v1232
    %v2349 = vpop.f32.mrf.mxu0
    %v2350 = vadd.f32 0.0, %v2349
    %v2351 = vpop.f32.mrf.mxu0
    %v2352 = vpop.f32.mrf.mxu0
    %v2353 = vadd.f32 0.0, %v2352
    %v2354 = vpop.f32.mrf.mxu0
    %2355 = vdwg.mxu0
    %2356 = vmatprep.subr.bf16.mxu0 0
    %2357 = vmatpush1.bf16.msra.mxu0 0
    %2358 = vmatprep.subr.bf16.mxu0 0
    %2359 = vmatpush1.bf16.msra.mxu0 0
    %2360 = vmatprep.subr.bf16.mxu0 0
    %2361 = vmatpush1.bf16.msra.mxu0 0
    %2362 = vmatprep.subr.bf16.mxu0 0
    %2363 = vmatpush1.bf16.msra.mxu0 0
    %2364 = vmatprep.subr.bf16.mxu0 0
    %2365 = vmatpush1.bf16.msra.mxu0 0
    %2366 = vmatprep.subr.bf16.mxu0 0
    %2367 = vmatpush1.bf16.msra.mxu0 0
    %2368 = vmatprep.subr.bf16.mxu0 0
    %2369 = vmatpush1.bf16.msra.mxu0 0
    %2370 = vmatprep.subr.bf16.mxu0 0
    %2371 = vmatpush1.bf16.msra.mxu0 %v1740
    %2372 = vmatprep.subr.bf16.mxu0 0
    %2373 = vmatpush2.bf16.msra.mxu0 0
    %2374 = vmatprep.subr.bf16.mxu0 0
    %2375 = vmatpush2.bf16.msra.mxu0 0
    %2376 = vmatprep.subr.bf16.mxu0 0
    %2377 = vmatpush2.bf16.msra.mxu0 0
    %2378 = vmatprep.subr.bf16.mxu0 0
    %2379 = vmatpush2.bf16.msra.mxu0 0
    %2380 = vmatprep.subr.bf16.mxu0 0
    %2381 = vmatpush2.bf16.msra.mxu0 0
    %2382 = vmatprep.subr.bf16.mxu0 0
    %2383 = vmatpush2.bf16.msra.mxu0 0
    %2384 = vmatprep.subr.bf16.mxu0 0
    %2385 = vmatpush2.bf16.msra.mxu0 0
    %2386 = vmatprep.subr.bf16.mxu0 0
    %2387 = vmatpush2.bf16.msra.mxu0 0
    %2388 = vmatprep.mubr.bf16.mxu0 0
    %2389 = vmatmul.mubr.bf16.gmra.mxu0 %v1281
    %v2390 = vpop.f32.mrf.mxu0
    %v2391 = vadd.f32 0.0, %v2390
    %v2392 = vpop.f32.mrf.mxu0
    %v2393 = vpop.f32.mrf.mxu0
    %v2394 = vadd.f32 0.0, %v2393
    %v2395 = vpop.f32.mrf.mxu0
    %2396 = vdwg.mxu0
    %v2397 = vmax.f32 %v1776, 0.0
    %v2398 = vmax.f32 %v1779, 0.0
    %v2399 = vmax.f32 %v1817, 0.0
    %v2400 = vmax.f32 %v1820, 0.0
    %v2401 = vmax.f32 %v1858, 0.0
    %v2402 = vmax.f32 %v1861, 0.0
    %v2403 = vmax.f32 %v1899, 0.0
    %v2404 = vmax.f32 %v1902, 0.0
    %v2405 = vmax.f32 %v1940, 0.0
    %v2406 = vmax.f32 %v1943, 0.0
    %v2407 = vmax.f32 %v1981, 0.0
    %v2408 = vmax.f32 %v1984, 0.0
    %v2409 = vmax.f32 %v2022, 0.0
    %v2410 = vmax.f32 %v2025, 0.0
    %v2411 = vmax.f32 %v2063, 0.0
    %v2412 = vmax.f32 %v2066, 0.0
    %v2413 = vmax.f32 %v2104, 0.0
    %v2414 = vmax.f32 %v2107, 0.0
    %v2415 = vmax.f32 %v2145, 0.0
    %v2416 = vmax.f32 %v2148, 0.0
    %v2417 = vmax.f32 %v2186, 0.0
    %v2418 = vmax.f32 %v2189, 0.0
    %v2419 = vmax.f32 %v2227, 0.0
    %v2420 = vmax.f32 %v2230, 0.0
    %v2421 = vmax.f32 %v2268, 0.0
    %v2422 = vmax.f32 %v2271, 0.0
    %v2423 = vmax.f32 %v2309, 0.0
    %v2424 = vmax.f32 %v2312, 0.0
    %v2425 = vmax.f32 %v2350, 0.0
    %v2426 = vmax.f32 %v2353, 0.0
    %v2427 = vmax.f32 %v2391, 0.0
    %v2428 = vmax.f32 %v2394, 0.0
    %v2429 = vmax.f32 %v1569, 0.0
    %v2430 = vmax.f32 %v1573, 0.0
    %v2431 = vmax.f32 %v1579, 0.0
    %v2432 = vmax.f32 %v1583, 0.0
    %v2433 = vmax.f32 %v1589, 0.0
    %v2434 = vmax.f32 %v1593, 0.0
    %v2435 = vmax.f32 %v1599, 0.0
    %v2436 = vmax.f32 %v1603, 0.0
    %v2437 = vmax.f32 %v1609, 0.0
    %v2438 = vmax.f32 %v1613, 0.0
    %v2439 = vmax.f32 %v1619, 0.0
    %v2440 = vmax.f32 %v1623, 0.0
    %v2441 = vmax.f32 %v1629, 0.0
    %v2442 = vmax.f32 %v1633, 0.0
    %v2443 = vmax.f32 %v1639, 0.0
    %v2444 = vmax.f32 %v1643, 0.0
    %v2445 = vmax.f32 %v1649, 0.0
    %v2446 = vmax.f32 %v1653, 0.0
    %v2447 = vmax.f32 %v1659, 0.0
    %v2448 = vmax.f32 %v1663, 0.0
    %v2449 = vmax.f32 %v1669, 0.0
    %v2450 = vmax.f32 %v1673, 0.0
    %v2451 = vmax.f32 %v1679, 0.0
    %v2452 = vmax.f32 %v1683, 0.0
    %v2453 = vmax.f32 %v1689, 0.0
    %v2454 = vmax.f32 %v1693, 0.0
    %v2455 = vmax.f32 %v1699, 0.0
    %v2456 = vmax.f32 %v1703, 0.0
    %v2457 = vmax.f32 %v1709, 0.0
    %v2458 = vmax.f32 %v1713, 0.0
    %v2459 = vmax.f32 %v1719, 0.0
    %v2460 = vmax.f32 %v1723, 0.0
    %v2461 = vadd.f32 %v2397, %v2429
    %v2462 = vadd.f32 %v2398, %v2430
    %v2463 = vadd.f32 %v2399, %v2431
    %v2464 = vadd.f32 %v2400, %v2432
    %v2465 = vadd.f32 %v2401, %v2433
    %v2466 = vadd.f32 %v2402, %v2434
    %v2467 = vadd.f32 %v2403, %v2435
    %v2468 = vadd.f32 %v2404, %v2436
    %v2469 = vadd.f32 %v2405, %v2437
    %v2470 = vadd.f32 %v2406, %v2438
    %v2471 = vadd.f32 %v2407, %v2439
    %v2472 = vadd.f32 %v2408, %v2440
    %v2473 = vadd.f32 %v2409, %v2441
    %v2474 = vadd.f32 %v2410, %v2442
    %v2475 = vadd.f32 %v2411, %v2443
    %v2476 = vadd.f32 %v2412, %v2444
    %v2477 = vadd.f32 %v2413, %v2445
    %v2478 = vadd.f32 %v2414, %v2446
    %v2479 = vadd.f32 %v2415, %v2447
    %v2480 = vadd.f32 %v2416, %v2448
    %v2481 = vadd.f32 %v2417, %v2449
    %v2482 = vadd.f32 %v2418, %v2450
    %v2483 = vadd.f32 %v2419, %v2451
    %v2484 = vadd.f32 %v2420, %v2452
    %v2485 = vadd.f32 %v2421, %v2453
    %v2486 = vadd.f32 %v2422, %v2454
    %v2487 = vadd.f32 %v2423, %v2455
    %v2488 = vadd.f32 %v2424, %v2456
    %v2489 = vadd.f32 %v2425, %v2457
    %v2490 = vadd.f32 %v2426, %v2458
    %v2491 = vadd.f32 %v2427, %v2459
    %v2492 = vadd.f32 %v2428, %v2460
    %v2493 = vadd.f32 %v2461, %v2462
    %v2494 = vrot.slane %v2493, 4
    %v2495 = vadd.f32 %v2493, %v2494
    %v2496 = vrot.slane %v2495, 2
    %v2497 = vadd.f32 %v2495, %v2496
    %v2498 = vrot.slane %v2497, 1
    %v2499 = vadd.f32 %v2497, %v2498
    %v2500 = vadd.f32 %v2463, %v2464
    %v2501 = vrot.slane %v2500, 4
    %v2502 = vadd.f32 %v2500, %v2501
    %v2503 = vrot.slane %v2502, 2
    %v2504 = vadd.f32 %v2502, %v2503
    %v2505 = vrot.slane %v2504, 1
    %v2506 = vadd.f32 %v2504, %v2505
    %v2507 = vadd.f32 %v2465, %v2466
    %v2508 = vrot.slane %v2507, 4
    %v2509 = vadd.f32 %v2507, %v2508
    %v2510 = vrot.slane %v2509, 2
    %v2511 = vadd.f32 %v2509, %v2510
    %v2512 = vrot.slane %v2511, 1
    %v2513 = vadd.f32 %v2511, %v2512
    %v2514 = vadd.f32 %v2467, %v2468
    %v2515 = vrot.slane %v2514, 4
    %v2516 = vadd.f32 %v2514, %v2515
    %v2517 = vrot.slane %v2516, 2
    %v2518 = vadd.f32 %v2516, %v2517
    %v2519 = vrot.slane %v2518, 1
    %v2520 = vadd.f32 %v2518, %v2519
    %v2521 = vadd.f32 %v2469, %v2470
    %v2522 = vrot.slane %v2521, 4
    %v2523 = vadd.f32 %v2521, %v2522
    %v2524 = vrot.slane %v2523, 2
    %v2525 = vadd.f32 %v2523, %v2524
    %v2526 = vrot.slane %v2525, 1
    %v2527 = vadd.f32 %v2525, %v2526
    %v2528 = vadd.f32 %v2471, %v2472
    %v2529 = vrot.slane %v2528, 4
    %v2530 = vadd.f32 %v2528, %v2529
    %v2531 = vrot.slane %v2530, 2
    %v2532 = vadd.f32 %v2530, %v2531
    %v2533 = vrot.slane %v2532, 1
    %v2534 = vadd.f32 %v2532, %v2533
    %v2535 = vadd.f32 %v2473, %v2474
    %v2536 = vrot.slane %v2535, 4
    %v2537 = vadd.f32 %v2535, %v2536
    %v2538 = vrot.slane %v2537, 2
    %v2539 = vadd.f32 %v2537, %v2538
    %v2540 = vrot.slane %v2539, 1
    %v2541 = vadd.f32 %v2539, %v2540
    %v2542 = vadd.f32 %v2475, %v2476
    %v2543 = vrot.slane %v2542, 4
    %v2544 = vadd.f32 %v2542, %v2543
    %v2545 = vrot.slane %v2544, 2
    %v2546 = vadd.f32 %v2544, %v2545
    %v2547 = vrot.slane %v2546, 1
    %v2548 = vadd.f32 %v2546, %v2547
    %v2549 = vadd.f32 %v2477, %v2478
    %v2550 = vrot.slane %v2549, 4
    %v2551 = vadd.f32 %v2549, %v2550
    %v2552 = vrot.slane %v2551, 2
    %v2553 = vadd.f32 %v2551, %v2552
    %v2554 = vrot.slane %v2553, 1
    %v2555 = vadd.f32 %v2553, %v2554
    %v2556 = vadd.f32 %v2479, %v2480
    %v2557 = vrot.slane %v2556, 4
    %v2558 = vadd.f32 %v2556, %v2557
    %v2559 = vrot.slane %v2558, 2
    %v2560 = vadd.f32 %v2558, %v2559
    %v2561 = vrot.slane %v2560, 1
    %v2562 = vadd.f32 %v2560, %v2561
    %v2563 = vadd.f32 %v2481, %v2482
    %v2564 = vrot.slane %v2563, 4
    %v2565 = vadd.f32 %v2563, %v2564
    %v2566 = vrot.slane %v2565, 2
    %v2567 = vadd.f32 %v2565, %v2566
    %v2568 = vrot.slane %v2567, 1
    %v2569 = vadd.f32 %v2567, %v2568
    %v2570 = vadd.f32 %v2483, %v2484
    %v2571 = vrot.slane %v2570, 4
    %v2572 = vadd.f32 %v2570, %v2571
    %v2573 = vrot.slane %v2572, 2
    %v2574 = vadd.f32 %v2572, %v2573
    %v2575 = vrot.slane %v2574, 1
    %v2576 = vadd.f32 %v2574, %v2575
    %v2577 = vadd.f32 %v2485, %v2486
    %v2578 = vrot.slane %v2577, 4
    %v2579 = vadd.f32 %v2577, %v2578
    %v2580 = vrot.slane %v2579, 2
    %v2581 = vadd.f32 %v2579, %v2580
    %v2582 = vrot.slane %v2581, 1
    %v2583 = vadd.f32 %v2581, %v2582
    %v2584 = vadd.f32 %v2487, %v2488
    %v2585 = vrot.slane %v2584, 4
    %v2586 = vadd.f32 %v2584, %v2585
    %v2587 = vrot.slane %v2586, 2
    %v2588 = vadd.f32 %v2586, %v2587
    %v2589 = vrot.slane %v2588, 1
    %v2590 = vadd.f32 %v2588, %v2589
    %v2591 = vadd.f32 %v2489, %v2490
    %v2592 = vrot.slane %v2591, 4
    %v2593 = vadd.f32 %v2591, %v2592
    %v2594 = vrot.slane %v2593, 2
    %v2595 = vadd.f32 %v2593, %v2594
    %v2596 = vrot.slane %v2595, 1
    %v2597 = vadd.f32 %v2595, %v2596
    %v2598 = vadd.f32 %v2491, %v2492
    %v2599 = vrot.slane %v2598, 4
    %v2600 = vadd.f32 %v2598, %v2599
    %v2601 = vrot.slane %v2600, 2
    %v2602 = vadd.f32 %v2600, %v2601
    %v2603 = vrot.slane %v2602, 1
    %v2604 = vadd.f32 %v2602, %v2603
    %vm2621 = vcmask 1041409
    %v2622 = vsel %vm2621, %v2506, %v2499
    %vm2623 = vcmask 1042434
    %v2624 = vsel %vm2623, %v2513, %v2622
    %vm2625 = vcmask 1043459
    %v2626 = vsel %vm2625, %v2520, %v2624
    %vm2627 = vcmask 1044484
    %v2628 = vsel %vm2627, %v2527, %v2626
    %vm2629 = vcmask 1045509
    %v2630 = vsel %vm2629, %v2534, %v2628
    %vm2631 = vcmask 1046534
    %v2632 = vsel %vm2631, %v2541, %v2630
    %vm2633 = vcmask 1047559
    %v2634 = vsel %vm2633, %v2548, %v2632
    %v2635 = vsel %vm2621, %v2562, %v2555
    %v2636 = vsel %vm2623, %v2569, %v2635
    %v2637 = vsel %vm2625, %v2576, %v2636
    %v2638 = vsel %vm2627, %v2583, %v2637
    %v2639 = vsel %vm2629, %v2590, %v2638
    %v2640 = vsel %vm2631, %v2597, %v2639
    %v2641 = vsel %vm2633, %v2604, %v2640
    %2644 = vst [vmem:[#allocation10] sm:$0xff] %v2634
    %2645 = vst [vmem:[#allocation10 + $0x8] sm:$0xff] %v2641
    // Predicated region
    $region34: #{tpu_custom_call.1} parent=1 // pred_check
      _
    $region35: #{tpu_custom_call.1} parent=1 // pred_check_branch
      %2647 = sbr.rel (0) target = $region37
    $region36: #{tpu_custom_call.1} parent=1 // pred_region
      %s2649 = ssub.s32 256, 256
      %2650 = vsyncadd [#allocation4], %s2649
      %s2651 = sshll.u32 [#allocation10], 4
      %s2652 = int_to_ptr.vmem [resolvable:$true] %s2651
      %2657 = dma.vmem_to_hbm [thread:$0]  %s2652, 256, %s4, [#allocation4], 128, 128, 8
    $region37: #{tpu_custom_call.1} parent=1 // pred_fallthru
      _
    // Predicated region
    $region38: #{tpu_custom_call.1} parent=1 // pred_check
      _
    $region39: #{tpu_custom_call.1} parent=1 // pred_check_branch
      %2659 = sbr.rel (0) target = $region41
    $region40: #{tpu_custom_call.1} parent=1 // pred_region
      %2660 = dma.done [#allocation4], 256
    $region41: #{tpu_custom_call.1} parent=1 // pred_fallthru
      _
    %2661 = vsyncpa [#allocation3], 1
    %2662 = vsyncpa [#allocation6], 1
    %2663 = vsyncpa [#allocation9], 1
    %2664 = vsyncpa [#allocation4], 1

</llo_original>
